<compile_context>
chip_gen: v5e
topology: v5e:2x2
jax: 0.10.0
libtpu: 0.0.40
codegen_flags: <defaults>
</compile_context>

<pallas_src>
import functools

import jax
import jax.numpy as jnp
from jax import lax
from jax.experimental import pallas as pl
from jax.experimental.pallas import tpu as pltpu


def _round_up(x, m):
  return (x + m - 1) // m * m


def _largest_divisor_leq(n, m):
  best = 1
  for d in range(1, min(n, m) + 1):
    if n % d == 0:
      best = d
  return best


def _choose_batch_block(bp, sub):
  """>=2 batch blocks let v7x's 2 TensorCores work on independent sequences.

  Only split when per-block M stays large, so 1-TC chips (v5e/v6e) are not
  forced through extra serial recurrence chains.
  """
  if bp >= 4 * sub and (bp // 2) % sub == 0:
    return bp // 2
  return bp


def _choose_block_t(t_len, bb, ip, hp, itemsize, max_tt=32, budget=8 << 20):
  """Timesteps per grid step, bounded by a per-block VMEM budget."""
  per_step = 2 * bb * ip * itemsize + bb * 4 * hp * 4  # x (dbl-buf) + x_proj
  cap = max(1, min(max_tt, budget // max(per_step, 1), t_len))
  best = _largest_divisor_leq(t_len, cap)
  if best >= min(t_len, 8):
    return best  # divides T -> no time padding / masking needed
  return cap     # pad T to a multiple of cap; mask inside the kernel


def _lstm_kernel(x_ref, wx_ref, wh_ref, b_ref, h_out_ref, c_sc, xproj_sc, *,
                 block_t, batch_b, hidden_p, seq_len, needs_mask, unroll):
  """One grid step == `block_t` LSTM timesteps for one batch block.

  x_ref     : (block_t, batch_b, Ip)   time-major input block (compute dtype)
  wx_ref    : (Ip, 4*Hp)               input->gates weight (compute dtype)
  wh_ref    : (Hp, 4*Hp)               hidden->gates weight (compute dtype)
  b_ref     : (1, 4*Hp)                b_ih + b_hh, f32, gate-padded
  h_out_ref : (batch_b, Hp)            resident hidden state == kernel output
  c_sc      : (batch_b, Hp)            cell state scratch (f32)
  xproj_sc  : (block_t*batch_b, 4*Hp)  block-wide input projection (f32)
  """
  t = pl.program_id(1)

  @pl.when(t == 0)
  def _():
    h_out_ref[...] = jnp.zeros_like(h_out_ref)
    c_sc[...] = jnp.zeros_like(c_sc)

  # Off-recurrence: one big MXU matmul for the whole time block, bias folded.
  x_blk = x_ref[...].reshape(block_t * batch_b, x_ref.shape[-1])
  xproj_sc[...] = (
      jnp.dot(x_blk, wx_ref[...], preferred_element_type=jnp.float32)
      + b_ref[...])

  w_h = wh_ref[...]
  cdt = w_h.dtype

  def one_step(s, h, c):
    row = pl.multiple_of(s * batch_b, 8)
    gates = xproj_sc[pl.ds(row, batch_b), :] + jnp.dot(
        h.astype(cdt), w_h, preferred_element_type=jnp.float32)
    # Lane-aligned gate slices; PyTorch gate order [i, f, g, o].
    i_g = jax.nn.sigmoid(gates[:, 0 * hidden_p:1 * hidden_p])
    f_g = jax.nn.sigmoid(gates[:, 1 * hidden_p:2 * hidden_p])
    g_g = jnp.tanh(gates[:, 2 * hidden_p:3 * hidden_p])
    o_g = jax.nn.sigmoid(gates[:, 3 * hidden_p:4 * hidden_p])
    c_new = f_g * c + i_g * g_g
    h_new = o_g * jnp.tanh(c_new)
    if needs_mask:
      valid = (t * block_t + s) < seq_len
      h_new = jnp.where(valid, h_new, h)
      c_new = jnp.where(valid, c_new, c)
    return h_new, c_new

  def body(u, carry):
    h, c = carry
    base = u * unroll
    for k in range(unroll):  # static partial unroll (bounds vreg pressure)
      h, c = one_step(base + k, h, c)
    return h, c

  h, c = lax.fori_loop(0, block_t // unroll, body,
                       (h_out_ref[...], c_sc[...]))
  h_out_ref[...] = h
  c_sc[...] = c


def fast_lstm_forward(x, w_ih, w_hh, b_ih, b_hh, w_fc, b_fc,
                      compute_dtype=jnp.bfloat16):
  """Pallas implementation of FastLSTM.forward (inference).

  x    : (B, T, I) batch-first, float32
  w_ih : (4H, I), w_hh: (4H, H), b_ih/b_hh: (4H,)  (PyTorch nn.LSTM layout)
  w_fc : (O, H), b_fc: (O,)                        (PyTorch nn.Linear layout)
  compute_dtype : matmul operand dtype (bf16 default; state/accum stay f32).
  returns (B, O)
  """
  B, T, I = x.shape
  H = w_hh.shape[1]
  f32 = jnp.float32

  if T == 0:
    h_last = jnp.zeros((B, H), f32)
    return h_last @ jnp.transpose(w_fc).astype(f32) + b_fc.astype(f32)

  itemsize = jnp.dtype(compute_dtype).itemsize
  sub = 8 * (4 // itemsize)            # sublane packing: 8 (f32) / 16 (bf16)
  Bp = _round_up(B, sub)
  Ip = _round_up(I, 128)
  Hp = _round_up(H, 128)
  bB = _choose_batch_block(Bp, sub)
  block_t = _choose_block_t(T, bB, Ip, Hp, itemsize)
  T_pad = _round_up(T, block_t)
  needs_mask = T_pad != T
  n_b = Bp // bB
  n_t = T_pad // block_t
  unroll = _largest_divisor_leq(block_t, 8)

  # --- parameter packing (one-time, outside the kernel) ---
  def pad2(a, rows, cols):
    return jnp.pad(a, ((0, rows - a.shape[0]), (0, cols - a.shape[1])))

  w_x = jnp.concatenate(
      [pad2(jnp.transpose(w_ih[g * H:(g + 1) * H, :]).astype(f32), Ip, Hp)
       for g in range(4)], axis=1).astype(compute_dtype)          # (Ip, 4Hp)
  w_h = jnp.concatenate(
      [pad2(jnp.transpose(w_hh[g * H:(g + 1) * H, :]).astype(f32), Hp, Hp)
       for g in range(4)], axis=1).astype(compute_dtype)          # (Hp, 4Hp)
  b_sum = (b_ih + b_hh).astype(f32)
  b_f = jnp.concatenate(
      [jnp.pad(b_sum[g * H:(g + 1) * H], (0, Hp - H)) for g in range(4)]
  )[None, :]                                                      # (1, 4Hp)

  # Time-major input, zero-padded (exact: padded gate weights/bias are zero).
  x_tm = jnp.transpose(x, (1, 0, 2)).astype(compute_dtype)        # (T, B, I)
  if (T_pad, Bp, Ip) != (T, B, I):
    x_tm = jnp.pad(x_tm, ((0, T_pad - T), (0, Bp - B), (0, Ip - I)))

  kernel = functools.partial(
      _lstm_kernel, block_t=block_t, batch_b=bB, hidden_p=Hp, seq_len=T,
      needs_mask=needs_mask, unroll=unroll)

  # VMEM budget (double-buffered inputs/outputs + scratch), guarded against
  # the chip's physical capacity (v7x: 64 MiB, v5e/v6e: 128 MiB).
  vmem_est = (2 * (Ip + Hp) * 4 * Hp * itemsize      # W_x + W_h
              + 2 * 4 * Hp * 4                       # bias
              + 2 * block_t * bB * Ip * itemsize     # x block
              + 2 * bB * Hp * 4                      # resident h output
              + bB * Hp * 4                          # c scratch
              + block_t * bB * 4 * Hp * 4)           # x-projection scratch
  try:
    vmem_cap = int(pltpu.get_tpu_info().vmem_capacity_bytes)
  except Exception:
    vmem_cap = 64 * 1024 * 1024                      # conservative default
  vmem_limit = int(min(max(2 * vmem_est, 32 << 20),
                       max(32 << 20, (vmem_cap * 3) // 4)))

  grid_spec = pltpu.PrefetchScalarGridSpec(
      num_scalar_prefetch=0,
      grid=(n_b, n_t),                                # time innermost (serial)
      in_specs=[
          pl.BlockSpec((block_t, bB, Ip), lambda b, t: (t, b, 0)),
          pl.BlockSpec((Ip, 4 * Hp), lambda b, t: (0, 0)),
          pl.BlockSpec((Hp, 4 * Hp), lambda b, t: (0, 0)),
          pl.BlockSpec((1, 4 * Hp), lambda b, t: (0, 0)),
      ],
      out_specs=pl.BlockSpec((bB, Hp), lambda b, t: (b, 0)),
      scratch_shapes=[
          pltpu.VMEM((bB, Hp), f32),                  # cell state
          pltpu.VMEM((block_t * bB, 4 * Hp), f32),    # x projection
      ],
  )

  h_T = pl.pallas_call(
      kernel,
      out_shape=jax.ShapeDtypeStruct((Bp, Hp), f32),
      grid_spec=grid_spec,
      compiler_params=pltpu.CompilerParams(
          dimension_semantics=("parallel", "arbitrary"),
          vmem_limit_bytes=vmem_limit),
  )(x_tm, w_x, w_h, b_f)

  # Final Linear used exactly once -> plain XLA.  Dropout is identity (eval).
  h_last = h_T[:B, :H].astype(f32)
  return h_last @ jnp.transpose(w_fc).astype(f32) + b_fc.astype(f32)


def _reference_forward(x, w_ih, w_hh, b_ih, b_hh, w_fc, b_fc):
  """Pure-JAX reference mirroring torch.nn.LSTM + Linear (eval mode)."""
  B, T, I = x.shape
  H = w_hh.shape[1]

  def step(carry, x_t):
    h, c = carry
    gates = x_t @ w_ih.T + b_ih + h @ w_hh.T + b_hh
    i = jax.nn.sigmoid(gates[:, 0 * H:1 * H])
    f = jax.nn.sigmoid(gates[:, 1 * H:2 * H])
    g = jnp.tanh(gates[:, 2 * H:3 * H])
    o = jax.nn.sigmoid(gates[:, 3 * H:4 * H])
    c_new = f * c + i * g
    h_new = o * jnp.tanh(c_new)
    return (h_new, c_new), None

  h0 = jnp.zeros((B, H), jnp.float32)
  c0 = jnp.zeros((B, H), jnp.float32)
  (h_T, _), _ = lax.scan(step, (h0, c0), jnp.transpose(x, (1, 0, 2)))
  return h_T @ w_fc.T + b_fc


if __name__ == "__main__":
  # Shapes consistent with FastLSTM(input_size, hidden_size, output_size).
  batch, seq, input_size, hidden_size, output_size = 2, 8, 16, 32, 4

  key = jax.random.PRNGKey(0)
  keys = jax.random.split(key, 8)
  bound = 1.0 / jnp.sqrt(hidden_size)  # PyTorch default uniform init range

  x = jax.random.normal(keys[0], (batch, seq, input_size), jnp.float32)
  w_ih = jax.random.uniform(keys[1], (4 * hidden_size, input_size),
                            jnp.float32, -bound, bound)
  w_hh = jax.random.uniform(keys[2], (4 * hidden_size, hidden_size),
                            jnp.float32, -bound, bound)
  b_ih = jax.random.uniform(keys[3], (4 * hidden_size,), jnp.float32,
                            -bound, bound)
  b_hh = jax.random.uniform(keys[4], (4 * hidden_size,), jnp.float32,
                            -bound, bound)
  w_fc = jax.random.uniform(keys[5], (output_size, hidden_size), jnp.float32,
                            -bound, bound)
  b_fc = jax.random.uniform(keys[6], (output_size,), jnp.float32,
                            -bound, bound)

  ref = _reference_forward(x, w_ih, w_hh, b_ih, b_hh, w_fc, b_fc)

  # Default bf16-operand path (MXU-native on v5e/v6e/v7x); f32 state / accum.
  out = fast_lstm_forward(x, w_ih, w_hh, b_ih, b_hh, w_fc, b_fc)
  out = jax.block_until_ready(out)
  assert out.shape == (batch, output_size), out.shape
  assert jnp.all(jnp.isfinite(out))
  assert jnp.allclose(out, ref, rtol=5e-2, atol=5e-2), (out, ref)

  # f32-operand path (tighter numerics; MXU may still use multi-pass bf16).
  out_f32 = fast_lstm_forward(x, w_ih, w_hh, b_ih, b_hh, w_fc, b_fc,
                              compute_dtype=jnp.float32)
  out_f32 = jax.block_until_ready(out_f32)
  assert jnp.allclose(out_f32, ref, rtol=5e-3, atol=5e-3), (out_f32, ref)

  # Ragged-time path: T=37 is prime and larger than the 32-step time block, so
  # time is zero-padded and the state update is masked inside the kernel.
  x2 = jax.random.normal(keys[7], (3, 37, input_size), jnp.float32)
  ref2 = _reference_forward(x2, w_ih, w_hh, b_ih, b_hh, w_fc, b_fc)
  out2 = fast_lstm_forward(x2, w_ih, w_hh, b_ih, b_hh, w_fc, b_fc,
                           compute_dtype=jnp.float32)
  out2 = jax.block_until_ready(out2)
  assert out2.shape == (3, output_size), out2.shape
  assert jnp.allclose(out2, ref2, rtol=1e-2, atol=1e-2), (out2, ref2)

  print("KERNEL_OK")
</pallas_src>

<mosaic_0001>
module attributes {stable_mosaic.version = 11 : i64} {
  func.func @_lstm_kernel(%arg0: i32, %arg1: i32, %arg2: memref<8x16x128xbf16, #tpu.memory_space<vmem>>, %arg3: memref<128x512xbf16, #tpu.memory_space<vmem>>, %arg4: memref<128x512xbf16, #tpu.memory_space<vmem>>, %arg5: memref<1x512xf32, #tpu.memory_space<vmem>>, %arg6: memref<16x128xf32, #tpu.memory_space<vmem>>, %arg7: memref<16x128xf32, #tpu.memory_space<vmem>>, %arg8: memref<128x512xf32, #tpu.memory_space<vmem>>) attributes {dimension_semantics = [#tpu.dimension_semantics<parallel>, #tpu.dimension_semantics<arbitrary>], iteration_bounds = array<i64: 1, 1>, scalar_prefetch = 0 : i64, scratch_operands = 2 : i64, tpu.core_type = #tpu.core_type<tc>, window_params = [{transform_indices = @transform_0, window_bounds = array<i64: 8, 16, 128>}, {pipeline_mode = #tpu.pipeline_mode<synchronous>, transform_indices = @transform_1, window_bounds = array<i64: 128, 512>}, {pipeline_mode = #tpu.pipeline_mode<synchronous>, transform_indices = @transform_2, window_bounds = array<i64: 128, 512>}, {pipeline_mode = #tpu.pipeline_mode<synchronous>, transform_indices = @transform_3, window_bounds = array<i64: 1, 512>}, {transform_indices = @transform_4, window_bounds = array<i64: 16, 128>}]} {
    %c0_i32 = arith.constant 0 : i32
    %0 = arith.cmpi eq, %arg1, %c0_i32 : i32
    %1 = arith.extui %0 : i1 to i32
    %c0_i32_0 = arith.constant 0 : i32
    %2 = arith.cmpi ne, %1, %c0_i32_0 : i32
    scf.if %2 {
      %cst_69 = arith.constant 0.000000e+00 : f32
      %281 = vector.broadcast %cst_69 : f32 to vector<16x128xf32>
      %c0_70 = arith.constant 0 : index
      %c0_71 = arith.constant 0 : index
      %282 = vector.load %arg6[%c0_70, %c0_71] : memref<16x128xf32, #tpu.memory_space<vmem>>, vector<16x128xf32>
      tpu.vector_store %arg6[%c0_70, %c0_71], %281 {strides = array<i32>} : memref<16x128xf32, #tpu.memory_space<vmem>>, vector<16x128xf32>,
      %cst_72 = arith.constant 0.000000e+00 : f32
      %283 = vector.broadcast %cst_72 : f32 to vector<16x128xf32>
      %c0_73 = arith.constant 0 : index
      %c0_74 = arith.constant 0 : index
      %284 = vector.load %arg7[%c0_73, %c0_74] : memref<16x128xf32, #tpu.memory_space<vmem>>, vector<16x128xf32>
      tpu.vector_store %arg7[%c0_73, %c0_74], %283 {strides = array<i32>} : memref<16x128xf32, #tpu.memory_space<vmem>>, vector<16x128xf32>,
    } else {
    }
    %c0 = arith.constant 0 : index
    %c0_1 = arith.constant 0 : index
    %c0_2 = arith.constant 0 : index
    %3 = vector.load %arg2[%c0, %c0_1, %c0_2] : memref<8x16x128xbf16, #tpu.memory_space<vmem>>, vector<8x16x128xbf16>
    %4 = vector.shape_cast %3 : vector<8x16x128xbf16> to vector<128x128xbf16>
    %c0_3 = arith.constant 0 : index
    %c0_4 = arith.constant 0 : index
    %5 = vector.load %arg3[%c0_3, %c0_4] : memref<128x512xbf16, #tpu.memory_space<vmem>>, vector<128x512xbf16>
    %cst = arith.constant dense<0.000000e+00> : vector<128x512xf32>
    %6 = tpu.matmul %4, %5, %cst {dimension_numbers = #tpu.dot_dimension_numbers<[1], [0], [0], [1], [0, 0, 1, 1], [], []>} : vector<128x128xbf16>, vector<128x512xbf16>, vector<128x512xf32> -> vector<128x512xf32>
    %c0_5 = arith.constant 0 : index
    %c0_6 = arith.constant 0 : index
    %7 = vector.load %arg5[%c0_5, %c0_6] : memref<1x512xf32, #tpu.memory_space<vmem>>, vector<1x512xf32>
    %8 = vector.broadcast %7 : vector<1x512xf32> to vector<128x512xf32>
    %9 = arith.addf %6, %8 : vector<128x512xf32>
    %c0_7 = arith.constant 0 : index
    %c0_8 = arith.constant 0 : index
    %10 = vector.load %arg8[%c0_7, %c0_8] : memref<128x512xf32, #tpu.memory_space<vmem>>, vector<128x512xf32>
    tpu.vector_store %arg8[%c0_7, %c0_8], %9 {strides = array<i32>} : memref<128x512xf32, #tpu.memory_space<vmem>>, vector<128x512xf32>,
    %c0_9 = arith.constant 0 : index
    %c0_10 = arith.constant 0 : index
    %11 = vector.load %arg4[%c0_9, %c0_10] : memref<128x512xbf16, #tpu.memory_space<vmem>>, vector<128x512xbf16>
    %c0_11 = arith.constant 0 : index
    %c0_12 = arith.constant 0 : index
    %12 = vector.load %arg6[%c0_11, %c0_12] : memref<16x128xf32, #tpu.memory_space<vmem>>, vector<16x128xf32>
    %c0_13 = arith.constant 0 : index
    %c0_14 = arith.constant 0 : index
    %13 = vector.load %arg7[%c0_13, %c0_14] : memref<16x128xf32, #tpu.memory_space<vmem>>, vector<16x128xf32>
    %c0_i32_15 = arith.constant 0 : i32
    %c8_i32 = arith.constant 8 : i32
    %14 = arith.muli %c0_i32_15, %c8_i32 : i32
    %c0_i32_16 = arith.constant 0 : i32
    %15 = arith.addi %14, %c0_i32_16 : i32
    %c16_i32 = arith.constant 16 : i32
    %16 = arith.muli %15, %c16_i32 : i32
    %17 = tpu.assume_multiple %16, 8 : i32
    %18 = arith.index_cast %17 : i32 to index
    %c0_17 = arith.constant 0 : index
    %19 = vector.load %arg8[%18, %c0_17] : memref<128x512xf32, #tpu.memory_space<vmem>>, vector<16x512xf32>
    %20 = arith.truncf %12 : vector<16x128xf32> to vector<16x128xbf16>
    %cst_18 = arith.constant dense<0.000000e+00> : vector<16x512xf32>
    %21 = tpu.matmul %20, %11, %cst_18 {dimension_numbers = #tpu.dot_dimension_numbers<[1], [0], [0], [1], [0, 0, 1, 1], [], []>} : vector<16x128xbf16>, vector<128x512xbf16>, vector<16x512xf32> -> vector<16x512xf32>
    %22 = arith.addf %19, %21 : vector<16x512xf32>
    %23 = vector.extract_strided_slice %22 {offsets = [0, 0], sizes = [16, 128], strides = [1, 1]} : vector<16x512xf32> to vector<16x128xf32>
    %24 = arith.negf %23 : vector<16x128xf32>
    %25 = math.exp %24 : vector<16x128xf32>
    %cst_19 = arith.constant 1.000000e+00 : f32
    %26 = vector.broadcast %cst_19 : f32 to vector<16x128xf32>
    %27 = arith.addf %26, %25 : vector<16x128xf32>
    %28 = arith.divf %26, %27 : vector<16x128xf32>
    %29 = vector.extract_strided_slice %22 {offsets = [0, 128], sizes = [16, 128], strides = [1, 1]} : vector<16x512xf32> to vector<16x128xf32>
    %30 = arith.negf %29 : vector<16x128xf32>
    %31 = math.exp %30 : vector<16x128xf32>
    %cst_20 = arith.constant 1.000000e+00 : f32
    %32 = vector.broadcast %cst_20 : f32 to vector<16x128xf32>
    %33 = arith.addf %32, %31 : vector<16x128xf32>
    %34 = arith.divf %32, %33 : vector<16x128xf32>
    %35 = vector.extract_strided_slice %22 {offsets = [0, 256], sizes = [16, 128], strides = [1, 1]} : vector<16x512xf32> to vector<16x128xf32>
    %36 = math.tanh %35 : vector<16x128xf32>
    %37 = vector.extract_strided_slice %22 {offsets = [0, 384], sizes = [16, 128], strides = [1, 1]} : vector<16x512xf32> to vector<16x128xf32>
    %38 = arith.negf %37 : vector<16x128xf32>
    %39 = math.exp %38 : vector<16x128xf32>
    %cst_21 = arith.constant 1.000000e+00 : f32
    %40 = vector.broadcast %cst_21 : f32 to vector<16x128xf32>
    %41 = arith.addf %40, %39 : vector<16x128xf32>
    %42 = arith.divf %40, %41 : vector<16x128xf32>
    %43 = arith.mulf %34, %13 : vector<16x128xf32>
    %44 = arith.mulf %28, %36 : vector<16x128xf32>
    %45 = arith.addf %43, %44 : vector<16x128xf32>
    %46 = math.tanh %45 : vector<16x128xf32>
    %47 = arith.mulf %42, %46 : vector<16x128xf32>
    %c1_i32 = arith.constant 1 : i32
    %48 = arith.addi %14, %c1_i32 : i32
    %c16_i32_22 = arith.constant 16 : i32
    %49 = arith.muli %48, %c16_i32_22 : i32
    %50 = tpu.assume_multiple %49, 8 : i32
    %51 = arith.index_cast %50 : i32 to index
    %c0_23 = arith.constant 0 : index
    %52 = vector.load %arg8[%51, %c0_23] : memref<128x512xf32, #tpu.memory_space<vmem>>, vector<16x512xf32>
    %53 = arith.truncf %47 : vector<16x128xf32> to vector<16x128xbf16>
    %cst_24 = arith.constant dense<0.000000e+00> : vector<16x512xf32>
    %54 = tpu.matmul %53, %11, %cst_24 {dimension_numbers = #tpu.dot_dimension_numbers<[1], [0], [0], [1], [0, 0, 1, 1], [], []>} : vector<16x128xbf16>, vector<128x512xbf16>, vector<16x512xf32> -> vector<16x512xf32>
    %55 = arith.addf %52, %54 : vector<16x512xf32>
    %56 = vector.extract_strided_slice %55 {offsets = [0, 0], sizes = [16, 128], strides = [1, 1]} : vector<16x512xf32> to vector<16x128xf32>
    %57 = arith.negf %56 : vector<16x128xf32>
    %58 = math.exp %57 : vector<16x128xf32>
    %cst_25 = arith.constant 1.000000e+00 : f32
    %59 = vector.broadcast %cst_25 : f32 to vector<16x128xf32>
    %60 = arith.addf %59, %58 : vector<16x128xf32>
    %61 = arith.divf %59, %60 : vector<16x128xf32>
    %62 = vector.extract_strided_slice %55 {offsets = [0, 128], sizes = [16, 128], strides = [1, 1]} : vector<16x512xf32> to vector<16x128xf32>
    %63 = arith.negf %62 : vector<16x128xf32>
    %64 = math.exp %63 : vector<16x128xf32>
    %cst_26 = arith.constant 1.000000e+00 : f32
    %65 = vector.broadcast %cst_26 : f32 to vector<16x128xf32>
    %66 = arith.addf %65, %64 : vector<16x128xf32>
    %67 = arith.divf %65, %66 : vector<16x128xf32>
    %68 = vector.extract_strided_slice %55 {offsets = [0, 256], sizes = [16, 128], strides = [1, 1]} : vector<16x512xf32> to vector<16x128xf32>
    %69 = math.tanh %68 : vector<16x128xf32>
    %70 = vector.extract_strided_slice %55 {offsets = [0, 384], sizes = [16, 128], strides = [1, 1]} : vector<16x512xf32> to vector<16x128xf32>
    %71 = arith.negf %70 : vector<16x128xf32>
    %72 = math.exp %71 : vector<16x128xf32>
    %cst_27 = arith.constant 1.000000e+00 : f32
    %73 = vector.broadcast %cst_27 : f32 to vector<16x128xf32>
    %74 = arith.addf %73, %72 : vector<16x128xf32>
    %75 = arith.divf %73, %74 : vector<16x128xf32>
    %76 = arith.mulf %67, %45 : vector<16x128xf32>
    %77 = arith.mulf %61, %69 : vector<16x128xf32>
    %78 = arith.addf %76, %77 : vector<16x128xf32>
    %79 = math.tanh %78 : vector<16x128xf32>
    %80 = arith.mulf %75, %79 : vector<16x128xf32>
    %c2_i32 = arith.constant 2 : i32
    %81 = arith.addi %14, %c2_i32 : i32
    %c16_i32_28 = arith.constant 16 : i32
    %82 = arith.muli %81, %c16_i32_28 : i32
    %83 = tpu.assume_multiple %82, 8 : i32
    %84 = arith.index_cast %83 : i32 to index
    %c0_29 = arith.constant 0 : index
    %85 = vector.load %arg8[%84, %c0_29] : memref<128x512xf32, #tpu.memory_space<vmem>>, vector<16x512xf32>
    %86 = arith.truncf %80 : vector<16x128xf32> to vector<16x128xbf16>
    %cst_30 = arith.constant dense<0.000000e+00> : vector<16x512xf32>
    %87 = tpu.matmul %86, %11, %cst_30 {dimension_numbers = #tpu.dot_dimension_numbers<[1], [0], [0], [1], [0, 0, 1, 1], [], []>} : vector<16x128xbf16>, vector<128x512xbf16>, vector<16x512xf32> -> vector<16x512xf32>
    %88 = arith.addf %85, %87 : vector<16x512xf32>
    %89 = vector.extract_strided_slice %88 {offsets = [0, 0], sizes = [16, 128], strides = [1, 1]} : vector<16x512xf32> to vector<16x128xf32>
    %90 = arith.negf %89 : vector<16x128xf32>
    %91 = math.exp %90 : vector<16x128xf32>
    %cst_31 = arith.constant 1.000000e+00 : f32
    %92 = vector.broadcast %cst_31 : f32 to vector<16x128xf32>
    %93 = arith.addf %92, %91 : vector<16x128xf32>
    %94 = arith.divf %92, %93 : vector<16x128xf32>
    %95 = vector.extract_strided_slice %88 {offsets = [0, 128], sizes = [16, 128], strides = [1, 1]} : vector<16x512xf32> to vector<16x128xf32>
    %96 = arith.negf %95 : vector<16x128xf32>
    %97 = math.exp %96 : vector<16x128xf32>
    %cst_32 = arith.constant 1.000000e+00 : f32
    %98 = vector.broadcast %cst_32 : f32 to vector<16x128xf32>
    %99 = arith.addf %98, %97 : vector<16x128xf32>
    %100 = arith.divf %98, %99 : vector<16x128xf32>
    %101 = vector.extract_strided_slice %88 {offsets = [0, 256], sizes = [16, 128], strides = [1, 1]} : vector<16x512xf32> to vector<16x128xf32>
    %102 = math.tanh %101 : vector<16x128xf32>
    %103 = vector.extract_strided_slice %88 {offsets = [0, 384], sizes = [16, 128], strides = [1, 1]} : vector<16x512xf32> to vector<16x128xf32>
    %104 = arith.negf %103 : vector<16x128xf32>
    %105 = math.exp %104 : vector<16x128xf32>
    %cst_33 = arith.constant 1.000000e+00 : f32
    %106 = vector.broadcast %cst_33 : f32 to vector<16x128xf32>
    %107 = arith.addf %106, %105 : vector<16x128xf32>
    %108 = arith.divf %106, %107 : vector<16x128xf32>
    %109 = arith.mulf %100, %78 : vector<16x128xf32>
    %110 = arith.mulf %94, %102 : vector<16x128xf32>
    %111 = arith.addf %109, %110 : vector<16x128xf32>
    %112 = math.tanh %111 : vector<16x128xf32>
    %113 = arith.mulf %108, %112 : vector<16x128xf32>
    %c3_i32 = arith.constant 3 : i32
    %114 = arith.addi %14, %c3_i32 : i32
    %c16_i32_34 = arith.constant 16 : i32
    %115 = arith.muli %114, %c16_i32_34 : i32
    %116 = tpu.assume_multiple %115, 8 : i32
    %117 = arith.index_cast %116 : i32 to index
    %c0_35 = arith.constant 0 : index
    %118 = vector.load %arg8[%117, %c0_35] : memref<128x512xf32, #tpu.memory_space<vmem>>, vector<16x512xf32>
    %119 = arith.truncf %113 : vector<16x128xf32> to vector<16x128xbf16>
    %cst_36 = arith.constant dense<0.000000e+00> : vector<16x512xf32>
    %120 = tpu.matmul %119, %11, %cst_36 {dimension_numbers = #tpu.dot_dimension_numbers<[1], [0], [0], [1], [0, 0, 1, 1], [], []>} : vector<16x128xbf16>, vector<128x512xbf16>, vector<16x512xf32> -> vector<16x512xf32>
    %121 = arith.addf %118, %120 : vector<16x512xf32>
    %122 = vector.extract_strided_slice %121 {offsets = [0, 0], sizes = [16, 128], strides = [1, 1]} : vector<16x512xf32> to vector<16x128xf32>
    %123 = arith.negf %122 : vector<16x128xf32>
    %124 = math.exp %123 : vector<16x128xf32>
    %cst_37 = arith.constant 1.000000e+00 : f32
    %125 = vector.broadcast %cst_37 : f32 to vector<16x128xf32>
    %126 = arith.addf %125, %124 : vector<16x128xf32>
    %127 = arith.divf %125, %126 : vector<16x128xf32>
    %128 = vector.extract_strided_slice %121 {offsets = [0, 128], sizes = [16, 128], strides = [1, 1]} : vector<16x512xf32> to vector<16x128xf32>
    %129 = arith.negf %128 : vector<16x128xf32>
    %130 = math.exp %129 : vector<16x128xf32>
    %cst_38 = arith.constant 1.000000e+00 : f32
    %131 = vector.broadcast %cst_38 : f32 to vector<16x128xf32>
    %132 = arith.addf %131, %130 : vector<16x128xf32>
    %133 = arith.divf %131, %132 : vector<16x128xf32>
    %134 = vector.extract_strided_slice %121 {offsets = [0, 256], sizes = [16, 128], strides = [1, 1]} : vector<16x512xf32> to vector<16x128xf32>
    %135 = math.tanh %134 : vector<16x128xf32>
    %136 = vector.extract_strided_slice %121 {offsets = [0, 384], sizes = [16, 128], strides = [1, 1]} : vector<16x512xf32> to vector<16x128xf32>
    %137 = arith.negf %136 : vector<16x128xf32>
    %138 = math.exp %137 : vector<16x128xf32>
    %cst_39 = arith.constant 1.000000e+00 : f32
    %139 = vector.broadcast %cst_39 : f32 to vector<16x128xf32>
    %140 = arith.addf %139, %138 : vector<16x128xf32>
    %141 = arith.divf %139, %140 : vector<16x128xf32>
    %142 = arith.mulf %133, %111 : vector<16x128xf32>
    %143 = arith.mulf %127, %135 : vector<16x128xf32>
    %144 = arith.addf %142, %143 : vector<16x128xf32>
    %145 = math.tanh %144 : vector<16x128xf32>
    %146 = arith.mulf %141, %145 : vector<16x128xf32>
    %c4_i32 = arith.constant 4 : i32
    %147 = arith.addi %14, %c4_i32 : i32
    %c16_i32_40 = arith.constant 16 : i32
    %148 = arith.muli %147, %c16_i32_40 : i32
    %149 = tpu.assume_multiple %148, 8 : i32
    %150 = arith.index_cast %149 : i32 to index
    %c0_41 = arith.constant 0 : index
    %151 = vector.load %arg8[%150, %c0_41] : memref<128x512xf32, #tpu.memory_space<vmem>>, vector<16x512xf32>
    %152 = arith.truncf %146 : vector<16x128xf32> to vector<16x128xbf16>
    %cst_42 = arith.constant dense<0.000000e+00> : vector<16x512xf32>
    %153 = tpu.matmul %152, %11, %cst_42 {dimension_numbers = #tpu.dot_dimension_numbers<[1], [0], [0], [1], [0, 0, 1, 1], [], []>} : vector<16x128xbf16>, vector<128x512xbf16>, vector<16x512xf32> -> vector<16x512xf32>
    %154 = arith.addf %151, %153 : vector<16x512xf32>
    %155 = vector.extract_strided_slice %154 {offsets = [0, 0], sizes = [16, 128], strides = [1, 1]} : vector<16x512xf32> to vector<16x128xf32>
    %156 = arith.negf %155 : vector<16x128xf32>
    %157 = math.exp %156 : vector<16x128xf32>
    %cst_43 = arith.constant 1.000000e+00 : f32
    %158 = vector.broadcast %cst_43 : f32 to vector<16x128xf32>
    %159 = arith.addf %158, %157 : vector<16x128xf32>
    %160 = arith.divf %158, %159 : vector<16x128xf32>
    %161 = vector.extract_strided_slice %154 {offsets = [0, 128], sizes = [16, 128], strides = [1, 1]} : vector<16x512xf32> to vector<16x128xf32>
    %162 = arith.negf %161 : vector<16x128xf32>
    %163 = math.exp %162 : vector<16x128xf32>
    %cst_44 = arith.constant 1.000000e+00 : f32
    %164 = vector.broadcast %cst_44 : f32 to vector<16x128xf32>
    %165 = arith.addf %164, %163 : vector<16x128xf32>
    %166 = arith.divf %164, %165 : vector<16x128xf32>
    %167 = vector.extract_strided_slice %154 {offsets = [0, 256], sizes = [16, 128], strides = [1, 1]} : vector<16x512xf32> to vector<16x128xf32>
    %168 = math.tanh %167 : vector<16x128xf32>
    %169 = vector.extract_strided_slice %154 {offsets = [0, 384], sizes = [16, 128], strides = [1, 1]} : vector<16x512xf32> to vector<16x128xf32>
    %170 = arith.negf %169 : vector<16x128xf32>
    %171 = math.exp %170 : vector<16x128xf32>
    %cst_45 = arith.constant 1.000000e+00 : f32
    %172 = vector.broadcast %cst_45 : f32 to vector<16x128xf32>
    %173 = arith.addf %172, %171 : vector<16x128xf32>
    %174 = arith.divf %172, %173 : vector<16x128xf32>
    %175 = arith.mulf %166, %144 : vector<16x128xf32>
    %176 = arith.mulf %160, %168 : vector<16x128xf32>
    %177 = arith.addf %175, %176 : vector<16x128xf32>
    %178 = math.tanh %177 : vector<16x128xf32>
    %179 = arith.mulf %174, %178 : vector<16x128xf32>
    %c5_i32 = arith.constant 5 : i32
    %180 = arith.addi %14, %c5_i32 : i32
    %c16_i32_46 = arith.constant 16 : i32
    %181 = arith.muli %180, %c16_i32_46 : i32
    %182 = tpu.assume_multiple %181, 8 : i32
    %183 = arith.index_cast %182 : i32 to index
    %c0_47 = arith.constant 0 : index
    %184 = vector.load %arg8[%183, %c0_47] : memref<128x512xf32, #tpu.memory_space<vmem>>, vector<16x512xf32>
    %185 = arith.truncf %179 : vector<16x128xf32> to vector<16x128xbf16>
    %cst_48 = arith.constant dense<0.000000e+00> : vector<16x512xf32>
    %186 = tpu.matmul %185, %11, %cst_48 {dimension_numbers = #tpu.dot_dimension_numbers<[1], [0], [0], [1], [0, 0, 1, 1], [], []>} : vector<16x128xbf16>, vector<128x512xbf16>, vector<16x512xf32> -> vector<16x512xf32>
    %187 = arith.addf %184, %186 : vector<16x512xf32>
    %188 = vector.extract_strided_slice %187 {offsets = [0, 0], sizes = [16, 128], strides = [1, 1]} : vector<16x512xf32> to vector<16x128xf32>
    %189 = arith.negf %188 : vector<16x128xf32>
    %190 = math.exp %189 : vector<16x128xf32>
    %cst_49 = arith.constant 1.000000e+00 : f32
    %191 = vector.broadcast %cst_49 : f32 to vector<16x128xf32>
    %192 = arith.addf %191, %190 : vector<16x128xf32>
    %193 = arith.divf %191, %192 : vector<16x128xf32>
    %194 = vector.extract_strided_slice %187 {offsets = [0, 128], sizes = [16, 128], strides = [1, 1]} : vector<16x512xf32> to vector<16x128xf32>
    %195 = arith.negf %194 : vector<16x128xf32>
    %196 = math.exp %195 : vector<16x128xf32>
    %cst_50 = arith.constant 1.000000e+00 : f32
    %197 = vector.broadcast %cst_50 : f32 to vector<16x128xf32>
    %198 = arith.addf %197, %196 : vector<16x128xf32>
    %199 = arith.divf %197, %198 : vector<16x128xf32>
    %200 = vector.extract_strided_slice %187 {offsets = [0, 256], sizes = [16, 128], strides = [1, 1]} : vector<16x512xf32> to vector<16x128xf32>
    %201 = math.tanh %200 : vector<16x128xf32>
    %202 = vector.extract_strided_slice %187 {offsets = [0, 384], sizes = [16, 128], strides = [1, 1]} : vector<16x512xf32> to vector<16x128xf32>
    %203 = arith.negf %202 : vector<16x128xf32>
    %204 = math.exp %203 : vector<16x128xf32>
    %cst_51 = arith.constant 1.000000e+00 : f32
    %205 = vector.broadcast %cst_51 : f32 to vector<16x128xf32>
    %206 = arith.addf %205, %204 : vector<16x128xf32>
    %207 = arith.divf %205, %206 : vector<16x128xf32>
    %208 = arith.mulf %199, %177 : vector<16x128xf32>
    %209 = arith.mulf %193, %201 : vector<16x128xf32>
    %210 = arith.addf %208, %209 : vector<16x128xf32>
    %211 = math.tanh %210 : vector<16x128xf32>
    %212 = arith.mulf %207, %211 : vector<16x128xf32>
    %c6_i32 = arith.constant 6 : i32
    %213 = arith.addi %14, %c6_i32 : i32
    %c16_i32_52 = arith.constant 16 : i32
    %214 = arith.muli %213, %c16_i32_52 : i32
    %215 = tpu.assume_multiple %214, 8 : i32
    %216 = arith.index_cast %215 : i32 to index
    %c0_53 = arith.constant 0 : index
    %217 = vector.load %arg8[%216, %c0_53] : memref<128x512xf32, #tpu.memory_space<vmem>>, vector<16x512xf32>
    %218 = arith.truncf %212 : vector<16x128xf32> to vector<16x128xbf16>
    %cst_54 = arith.constant dense<0.000000e+00> : vector<16x512xf32>
    %219 = tpu.matmul %218, %11, %cst_54 {dimension_numbers = #tpu.dot_dimension_numbers<[1], [0], [0], [1], [0, 0, 1, 1], [], []>} : vector<16x128xbf16>, vector<128x512xbf16>, vector<16x512xf32> -> vector<16x512xf32>
    %220 = arith.addf %217, %219 : vector<16x512xf32>
    %221 = vector.extract_strided_slice %220 {offsets = [0, 0], sizes = [16, 128], strides = [1, 1]} : vector<16x512xf32> to vector<16x128xf32>
    %222 = arith.negf %221 : vector<16x128xf32>
    %223 = math.exp %222 : vector<16x128xf32>
    %cst_55 = arith.constant 1.000000e+00 : f32
    %224 = vector.broadcast %cst_55 : f32 to vector<16x128xf32>
    %225 = arith.addf %224, %223 : vector<16x128xf32>
    %226 = arith.divf %224, %225 : vector<16x128xf32>
    %227 = vector.extract_strided_slice %220 {offsets = [0, 128], sizes = [16, 128], strides = [1, 1]} : vector<16x512xf32> to vector<16x128xf32>
    %228 = arith.negf %227 : vector<16x128xf32>
    %229 = math.exp %228 : vector<16x128xf32>
    %cst_56 = arith.constant 1.000000e+00 : f32
    %230 = vector.broadcast %cst_56 : f32 to vector<16x128xf32>
    %231 = arith.addf %230, %229 : vector<16x128xf32>
    %232 = arith.divf %230, %231 : vector<16x128xf32>
    %233 = vector.extract_strided_slice %220 {offsets = [0, 256], sizes = [16, 128], strides = [1, 1]} : vector<16x512xf32> to vector<16x128xf32>
    %234 = math.tanh %233 : vector<16x128xf32>
    %235 = vector.extract_strided_slice %220 {offsets = [0, 384], sizes = [16, 128], strides = [1, 1]} : vector<16x512xf32> to vector<16x128xf32>
    %236 = arith.negf %235 : vector<16x128xf32>
    %237 = math.exp %236 : vector<16x128xf32>
    %cst_57 = arith.constant 1.000000e+00 : f32
    %238 = vector.broadcast %cst_57 : f32 to vector<16x128xf32>
    %239 = arith.addf %238, %237 : vector<16x128xf32>
    %240 = arith.divf %238, %239 : vector<16x128xf32>
    %241 = arith.mulf %232, %210 : vector<16x128xf32>
    %242 = arith.mulf %226, %234 : vector<16x128xf32>
    %243 = arith.addf %241, %242 : vector<16x128xf32>
    %244 = math.tanh %243 : vector<16x128xf32>
    %245 = arith.mulf %240, %244 : vector<16x128xf32>
    %c7_i32 = arith.constant 7 : i32
    %246 = arith.addi %14, %c7_i32 : i32
    %c16_i32_58 = arith.constant 16 : i32
    %247 = arith.muli %246, %c16_i32_58 : i32
    %248 = tpu.assume_multiple %247, 8 : i32
    %249 = arith.index_cast %248 : i32 to index
    %c0_59 = arith.constant 0 : index
    %250 = vector.load %arg8[%249, %c0_59] : memref<128x512xf32, #tpu.memory_space<vmem>>, vector<16x512xf32>
    %251 = arith.truncf %245 : vector<16x128xf32> to vector<16x128xbf16>
    %cst_60 = arith.constant dense<0.000000e+00> : vector<16x512xf32>
    %252 = tpu.matmul %251, %11, %cst_60 {dimension_numbers = #tpu.dot_dimension_numbers<[1], [0], [0], [1], [0, 0, 1, 1], [], []>} : vector<16x128xbf16>, vector<128x512xbf16>, vector<16x512xf32> -> vector<16x512xf32>
    %253 = arith.addf %250, %252 : vector<16x512xf32>
    %254 = vector.extract_strided_slice %253 {offsets = [0, 0], sizes = [16, 128], strides = [1, 1]} : vector<16x512xf32> to vector<16x128xf32>
    %255 = arith.negf %254 : vector<16x128xf32>
    %256 = math.exp %255 : vector<16x128xf32>
    %cst_61 = arith.constant 1.000000e+00 : f32
    %257 = vector.broadcast %cst_61 : f32 to vector<16x128xf32>
    %258 = arith.addf %257, %256 : vector<16x128xf32>
    %259 = arith.divf %257, %258 : vector<16x128xf32>
    %260 = vector.extract_strided_slice %253 {offsets = [0, 128], sizes = [16, 128], strides = [1, 1]} : vector<16x512xf32> to vector<16x128xf32>
    %261 = arith.negf %260 : vector<16x128xf32>
    %262 = math.exp %261 : vector<16x128xf32>
    %cst_62 = arith.constant 1.000000e+00 : f32
    %263 = vector.broadcast %cst_62 : f32 to vector<16x128xf32>
    %264 = arith.addf %263, %262 : vector<16x128xf32>
    %265 = arith.divf %263, %264 : vector<16x128xf32>
    %266 = vector.extract_strided_slice %253 {offsets = [0, 256], sizes = [16, 128], strides = [1, 1]} : vector<16x512xf32> to vector<16x128xf32>
    %267 = math.tanh %266 : vector<16x128xf32>
    %268 = vector.extract_strided_slice %253 {offsets = [0, 384], sizes = [16, 128], strides = [1, 1]} : vector<16x512xf32> to vector<16x128xf32>
    %269 = arith.negf %268 : vector<16x128xf32>
    %270 = math.exp %269 : vector<16x128xf32>
    %cst_63 = arith.constant 1.000000e+00 : f32
    %271 = vector.broadcast %cst_63 : f32 to vector<16x128xf32>
    %272 = arith.addf %271, %270 : vector<16x128xf32>
    %273 = arith.divf %271, %272 : vector<16x128xf32>
    %274 = arith.mulf %265, %243 : vector<16x128xf32>
    %275 = arith.mulf %259, %267 : vector<16x128xf32>
    %276 = arith.addf %274, %275 : vector<16x128xf32>
    %277 = math.tanh %276 : vector<16x128xf32>
    %278 = arith.mulf %273, %277 : vector<16x128xf32>
    %c1_i32_64 = arith.constant 1 : i32
    %c0_65 = arith.constant 0 : index
    %c0_66 = arith.constant 0 : index
    %279 = vector.load %arg6[%c0_65, %c0_66] : memref<16x128xf32, #tpu.memory_space<vmem>>, vector<16x128xf32>
    tpu.vector_store %arg6[%c0_65, %c0_66], %278 {strides = array<i32>} : memref<16x128xf32, #tpu.memory_space<vmem>>, vector<16x128xf32>,
    %c0_67 = arith.constant 0 : index
    %c0_68 = arith.constant 0 : index
    %280 = vector.load %arg7[%c0_67, %c0_68] : memref<16x128xf32, #tpu.memory_space<vmem>>, vector<16x128xf32>
    tpu.vector_store %arg7[%c0_67, %c0_68], %276 {strides = array<i32>} : memref<16x128xf32, #tpu.memory_space<vmem>>, vector<16x128xf32>,
    return
  }
  func.func @transform_0(%arg0: i32, %arg1: i32) -> (i32, i32, i32) {
    %c0_i32 = arith.constant 0 : i32
    %c0_i32_0 = arith.constant 0 : i32
    return %arg1, %arg0, %c0_i32 : i32, i32, i32
  }
  func.func @transform_1(%arg0: i32, %arg1: i32) -> (i32, i32) {
    %c0_i32 = arith.constant 0 : i32
    %c0_i32_0 = arith.constant 0 : i32
    %c0_i32_1 = arith.constant 0 : i32
    return %c0_i32, %c0_i32_0 : i32, i32
  }
  func.func @transform_2(%arg0: i32, %arg1: i32) -> (i32, i32) {
    %c0_i32 = arith.constant 0 : i32
    %c0_i32_0 = arith.constant 0 : i32
    %c0_i32_1 = arith.constant 0 : i32
    return %c0_i32, %c0_i32_0 : i32, i32
  }
  func.func @transform_3(%arg0: i32, %arg1: i32) -> (i32, i32) {
    %c0_i32 = arith.constant 0 : i32
    %c0_i32_0 = arith.constant 0 : i32
    %c0_i32_1 = arith.constant 0 : i32
    return %c0_i32, %c0_i32_0 : i32, i32
  }
  func.func @transform_4(%arg0: i32, %arg1: i32) -> (i32, i32) {
    %c0_i32 = arith.constant 0 : i32
    %c0_i32_0 = arith.constant 0 : i32
    return %arg0, %c0_i32 : i32, i32
  }
}

</mosaic_0001>

<llo_original>
// kernel: tpu_custom_call.1
$region0: #{tpu_custom_call.1}
  #allocation0 [shape = 'u32[]', space=smem, size = 0x4, offset = 0x4, fixed_abs, tag = 'smem constant byte address 0x4 - core index']
  #allocation1 [shape = 'u32[72,128]{1,0:T(1,128)}', space=vmem, size = 0x9000, scoped, tag = 'internal scratch']
  #allocation2 [shape = 'f32[16,128]{1,0:T(8,128)}', space=vmem, size = 0x2000, scoped, tag = 'scratch operand']
  #allocation3 [shape = 'f32[128,512]{1,0:T(8,128)}', space=vmem, size = 0x40000, scoped, tag = 'scratch operand']
  %s0 = inlined_call_operand.hbm [shape: bf16[8,16,128], index: 0, kind: input, shape index: {}]
  %s1 = inlined_call_operand.hbm [shape: bf16[128,512], index: 1, kind: input, shape index: {}]
  %s2 = inlined_call_operand.hbm [shape: bf16[128,512], index: 2, kind: input, shape index: {}]
  %s3 = inlined_call_operand.hbm [shape: f32[1,512], index: 3, kind: input, shape index: {}]
  %s4 = inlined_call_operand.hbm [shape: f32[16,128], index: 4, kind: output, shape index: {}]
  %s5 = sld [smem:[#allocation0]]
  $region46: #{tpu_custom_call.1} parent=0
    _
  %s7 = ssub.s32 1, %s5
  %s8 = scalar_select 0, %s7, %s5
  $region1: #{tpu_custom_call.1} parent=0
    #allocation4 [shape = 'u8[32768]{0}', space=vmem, size = 0x8000, scoped, tag = 'input window, operand 0, single buffered']
    #allocation5 [shape = 's32[1]{0}', space=sflag, size = 0x4, scoped, tag = 'scoped memory for tpu_custom_call.1']
    #allocation6 [shape = 's32[1]{0}', space=sflag, size = 0x4, scoped, tag = 'scoped memory for tpu_custom_call.1']
    #allocation7 [shape = 'u8[131072]{0}', space=vmem, size = 0x20000, scoped, tag = 'input window, operand 1, single buffered']
    #allocation8 [shape = 's32[1]{0}', space=sflag, size = 0x4, scoped, tag = 'scoped memory for tpu_custom_call.1']
    #allocation9 [shape = 'u8[131072]{0}', space=vmem, size = 0x20000, scoped, tag = 'input window, operand 2, single buffered']
    #allocation10 [shape = 'u8[2048]{0}', space=vmem, size = 0x800, scoped, tag = 'input window, operand 3, single buffered']
    #allocation11 [shape = 's32[1]{0}', space=sflag, size = 0x4, scoped, tag = 'scoped memory for tpu_custom_call.1']
    #allocation12 [shape = 'u8[8192]{0}', space=vmem, size = 0x2000, scoped, tag = 'output window, operand 0, single buffered']
    %9 = vsyncpa [#allocation5], 0
    %10 = vsyncpa [#allocation8], 0
    %11 = vsyncpa [#allocation11], 0
    %12 = vsyncpa [#allocation6], 0
    // Predicated region
    $region2: #{tpu_custom_call.1} parent=1 // pred_check
      _
    $region3: #{tpu_custom_call.1} parent=1 // pred_check_branch
      %14 = sbr.rel (0) target = $region5
    $region4: #{tpu_custom_call.1} parent=1 // pred_region
      %16 = vsyncadd [#allocation5], 0
      %s17 = sshll.u32 %s0, 4
      %s18 = int_to_ptr.hbm [resolvable:$true] %s17
      %s19 = sshll.u32 [#allocation4], 4
      %s20 = int_to_ptr.vmem [resolvable:$true] %s19
      %25 = dma.hbm_to_vmem [thread:$0]  %s18, 1024, %s20, [#allocation5], 64, 64, 4
    $region5: #{tpu_custom_call.1} parent=1 // pred_fallthru
      _
    // Predicated region
    $region6: #{tpu_custom_call.1} parent=1 // pred_check
      _
    $region7: #{tpu_custom_call.1} parent=1 // pred_check_branch
      %27 = sbr.rel (0) target = $region9
    $region8: #{tpu_custom_call.1} parent=1 // pred_region
      %29 = vsyncadd [#allocation8], 0
      %s30 = sshll.u32 %s1, 4
      %s31 = int_to_ptr.hbm [resolvable:$true] %s30
      %s32 = sshll.u32 [#allocation7], 4
      %s33 = int_to_ptr.vmem [resolvable:$true] %s32
      %38 = dma.hbm_to_vmem [thread:$0]  %s31, 4096, %s33, [#allocation8], 256, 256, 16
    $region9: #{tpu_custom_call.1} parent=1 // pred_fallthru
      _
    // Predicated region
    $region10: #{tpu_custom_call.1} parent=1 // pred_check
      _
    $region11: #{tpu_custom_call.1} parent=1 // pred_check_branch
      %40 = sbr.rel (0) target = $region13
    $region12: #{tpu_custom_call.1} parent=1 // pred_region
      %42 = vsyncadd [#allocation8], 0
      %s43 = sshll.u32 %s2, 4
      %s44 = int_to_ptr.hbm [resolvable:$true] %s43
      %s45 = sshll.u32 [#allocation9], 4
      %s46 = int_to_ptr.vmem [resolvable:$true] %s45
      %51 = dma.hbm_to_vmem [thread:$0]  %s44, 4096, %s46, [#allocation8], 256, 256, 16
    $region13: #{tpu_custom_call.1} parent=1 // pred_fallthru
      _
    // Predicated region
    $region14: #{tpu_custom_call.1} parent=1 // pred_check
      _
    $region15: #{tpu_custom_call.1} parent=1 // pred_check_branch
      %53 = sbr.rel (0) target = $region17
    $region16: #{tpu_custom_call.1} parent=1 // pred_region
      %55 = vsyncadd [#allocation11], 0
      %s57 = sshll.u32 %s3, 4
      %s58 = int_to_ptr.hbm [resolvable:$true] %s57
      %s59 = sshll.u32 [#allocation10], 4
      %s60 = int_to_ptr.vmem [resolvable:$true] %s59
      %62 = dma.hbm_to_vmem [thread:$0]  %s58, 64, %s60, [#allocation11]
    $region17: #{tpu_custom_call.1} parent=1 // pred_fallthru
      _
    // Predicated region
    $region18: #{tpu_custom_call.1} parent=1 // pred_check
      _
    $region19: #{tpu_custom_call.1} parent=1 // pred_check_branch
      %64 = sbr.rel (0) target = $region21
    $region20: #{tpu_custom_call.1} parent=1 // pred_region
      %66 = dma.done [#allocation5], 1024
    $region21: #{tpu_custom_call.1} parent=1 // pred_fallthru
      _
    // Predicated region
    $region22: #{tpu_custom_call.1} parent=1 // pred_check
      _
    $region23: #{tpu_custom_call.1} parent=1 // pred_check_branch
      %68 = sbr.rel (0) target = $region25
    $region24: #{tpu_custom_call.1} parent=1 // pred_region
      %70 = dma.done [#allocation8], 4096
    $region25: #{tpu_custom_call.1} parent=1 // pred_fallthru
      _
    // Predicated region
    $region26: #{tpu_custom_call.1} parent=1 // pred_check
      _
    $region27: #{tpu_custom_call.1} parent=1 // pred_check_branch
      %72 = sbr.rel (0) target = $region29
    $region28: #{tpu_custom_call.1} parent=1 // pred_region
      %74 = dma.done [#allocation8], 4096
    $region29: #{tpu_custom_call.1} parent=1 // pred_fallthru
      _
    // Predicated region
    $region30: #{tpu_custom_call.1} parent=1 // pred_check
      _
    $region31: #{tpu_custom_call.1} parent=1 // pred_check_branch
      %76 = sbr.rel (0) target = $region33
    $region32: #{tpu_custom_call.1} parent=1 // pred_region
      %78 = dma.done [#allocation11], 64
    $region33: #{tpu_custom_call.1} parent=1 // pred_fallthru
      _
    %p79 = scmp.eq.s32.totalorder 0, 0
    // Predicated region
    $region34: #{tpu_custom_call.1} parent=1 // pred_check
      %p80 = pneg %p79
    $region35: #{tpu_custom_call.1} parent=1 // pred_check_branch
      %82 = sbr.rel (%p80) target = $region37
    $region36: #{tpu_custom_call.1} parent=1 // pred_region
      %83 = vst [vmem:[#allocation12] sm:$0xff] 0.0
      %84 = vst [vmem:[#allocation12 + $0x8] sm:$0xff] 0.0
      %85 = vst [vmem:[#allocation2] sm:$0xff] 0.0
      %86 = vst [vmem:[#allocation2 + $0x8] sm:$0xff] 0.0
    $region37: #{tpu_custom_call.1} parent=1 // pred_fallthru
      _
    %v87 = vld [vmem:[#allocation4] sm:$0xf]
    %v88 = vld [vmem:[#allocation4 + $0x4] sm:$0xf]
    %v89 = vld [vmem:[#allocation4 + $0x8] sm:$0xf]
    %v90 = vld [vmem:[#allocation4 + $0xc] sm:$0xf]
    %v91 = vld [vmem:[#allocation4 + $0x10] sm:$0xf]
    %v92 = vld [vmem:[#allocation4 + $0x14] sm:$0xf]
    %v93 = vld [vmem:[#allocation4 + $0x18] sm:$0xf]
    %v94 = vld [vmem:[#allocation4 + $0x1c] sm:$0xf]
    %v95 = vld [vmem:[#allocation4 + $0x20] sm:$0xf]
    %v96 = vld [vmem:[#allocation4 + $0x24] sm:$0xf]
    %v97 = vld [vmem:[#allocation4 + $0x28] sm:$0xf]
    %v98 = vld [vmem:[#allocation4 + $0x2c] sm:$0xf]
    %v99 = vld [vmem:[#allocation4 + $0x30] sm:$0xf]
    %v100 = vld [vmem:[#allocation4 + $0x34] sm:$0xf]
    %v101 = vld [vmem:[#allocation4 + $0x38] sm:$0xf]
    %v102 = vld [vmem:[#allocation4 + $0x3c] sm:$0xf]
    %v103 = vld [vmem:[#allocation7] sm:$0xff]
    %v104 = vld [vmem:[#allocation7 + $0x8] sm:$0xff]
    %v105 = vld [vmem:[#allocation7 + $0x10] sm:$0xff]
    %v106 = vld [vmem:[#allocation7 + $0x18] sm:$0xff]
    %v107 = vld [vmem:[#allocation7 + $0x20] sm:$0xff]
    %v108 = vld [vmem:[#allocation7 + $0x28] sm:$0xff]
    %v109 = vld [vmem:[#allocation7 + $0x30] sm:$0xff]
    %v110 = vld [vmem:[#allocation7 + $0x38] sm:$0xff]
    %v111 = vld [vmem:[#allocation7 + $0x40] sm:$0xff]
    %v112 = vld [vmem:[#allocation7 + $0x48] sm:$0xff]
    %v113 = vld [vmem:[#allocation7 + $0x50] sm:$0xff]
    %v114 = vld [vmem:[#allocation7 + $0x58] sm:$0xff]
    %v115 = vld [vmem:[#allocation7 + $0x60] sm:$0xff]
    %v116 = vld [vmem:[#allocation7 + $0x68] sm:$0xff]
    %v117 = vld [vmem:[#allocation7 + $0x70] sm:$0xff]
    %v118 = vld [vmem:[#allocation7 + $0x78] sm:$0xff]
    %v119 = vld [vmem:[#allocation7 + $0x80] sm:$0xff]
    %v120 = vld [vmem:[#allocation7 + $0x88] sm:$0xff]
    %v121 = vld [vmem:[#allocation7 + $0x90] sm:$0xff]
    %v122 = vld [vmem:[#allocation7 + $0x98] sm:$0xff]
    %v123 = vld [vmem:[#allocation7 + $0xa0] sm:$0xff]
    %v124 = vld [vmem:[#allocation7 + $0xa8] sm:$0xff]
    %v125 = vld [vmem:[#allocation7 + $0xb0] sm:$0xff]
    %v126 = vld [vmem:[#allocation7 + $0xb8] sm:$0xff]
    %v127 = vld [vmem:[#allocation7 + $0xc0] sm:$0xff]
    %v128 = vld [vmem:[#allocation7 + $0xc8] sm:$0xff]
    %v129 = vld [vmem:[#allocation7 + $0xd0] sm:$0xff]
    %v130 = vld [vmem:[#allocation7 + $0xd8] sm:$0xff]
    %v131 = vld [vmem:[#allocation7 + $0xe0] sm:$0xff]
    %v132 = vld [vmem:[#allocation7 + $0xe8] sm:$0xff]
    %v133 = vld [vmem:[#allocation7 + $0xf0] sm:$0xff]
    %v134 = vld [vmem:[#allocation7 + $0xf8] sm:$0xff]
    %v135 = vld [vmem:[#allocation10] sm:$0xf]
    %v137 = vperm.slane %v135, 0
    %v138 = vperm.slane %v135, 1
    %v139 = vperm.slane %v135, 2
    %v140 = vperm.slane %v135, 3
    %v161 = vunpack.c.l.b16 %v87
    %v162 = vunpack.c.l.b16 %v88
    %v163 = vunpack.c.l.b16 %v89
    %v164 = vunpack.c.l.b16 %v90
    %v165 = vunpack.c.l.b16 %v91
    %v166 = vunpack.c.l.b16 %v92
    %v167 = vunpack.c.l.b16 %v93
    %v168 = vunpack.c.l.b16 %v94
    %v169 = vunpack.c.l.b16 %v95
    %v170 = vunpack.c.l.b16 %v96
    %v171 = vunpack.c.l.b16 %v97
    %v172 = vunpack.c.l.b16 %v98
    %v173 = vunpack.c.l.b16 %v99
    %v174 = vunpack.c.l.b16 %v100
    %v175 = vunpack.c.l.b16 %v101
    %v176 = vunpack.c.l.b16 %v102
    %v177 = vpack.c.b16 %v162, %v161
    %v178 = vpack.c.b16 %v164, %v163
    %v179 = vpack.c.b16 %v166, %v165
    %v180 = vpack.c.b16 %v168, %v167
    %v181 = vpack.c.b16 %v170, %v169
    %v182 = vpack.c.b16 %v172, %v171
    %v183 = vpack.c.b16 %v174, %v173
    %v184 = vpack.c.b16 %v176, %v175
    %v225 = vunpack.c.l.b16 %v103
    %v226 = vunpack.c.h.b16 %v103
    %v227 = vunpack.c.l.b16 %v104
    %v228 = vunpack.c.h.b16 %v104
    %v229 = vunpack.c.l.b16 %v105
    %v230 = vunpack.c.h.b16 %v105
    %v231 = vunpack.c.l.b16 %v106
    %v232 = vunpack.c.h.b16 %v106
    %v233 = vunpack.c.l.b16 %v107
    %v234 = vunpack.c.h.b16 %v107
    %v235 = vunpack.c.l.b16 %v108
    %v236 = vunpack.c.h.b16 %v108
    %v237 = vunpack.c.l.b16 %v109
    %v238 = vunpack.c.h.b16 %v109
    %v239 = vunpack.c.l.b16 %v110
    %v240 = vunpack.c.h.b16 %v110
    %v241 = vunpack.c.l.b16 %v111
    %v242 = vunpack.c.h.b16 %v111
    %v243 = vunpack.c.l.b16 %v112
    %v244 = vunpack.c.h.b16 %v112
    %v245 = vunpack.c.l.b16 %v113
    %v246 = vunpack.c.h.b16 %v113
    %v247 = vunpack.c.l.b16 %v114
    %v248 = vunpack.c.h.b16 %v114
    %v249 = vunpack.c.l.b16 %v115
    %v250 = vunpack.c.h.b16 %v115
    %v251 = vunpack.c.l.b16 %v116
    %v252 = vunpack.c.h.b16 %v116
    %v253 = vunpack.c.l.b16 %v117
    %v254 = vunpack.c.h.b16 %v117
    %v255 = vunpack.c.l.b16 %v118
    %v256 = vunpack.c.h.b16 %v118
    %v257 = vunpack.c.l.b16 %v119
    %v258 = vunpack.c.h.b16 %v119
    %v259 = vunpack.c.l.b16 %v120
    %v260 = vunpack.c.h.b16 %v120
    %v261 = vunpack.c.l.b16 %v121
    %v262 = vunpack.c.h.b16 %v121
    %v263 = vunpack.c.l.b16 %v122
    %v264 = vunpack.c.h.b16 %v122
    %v265 = vunpack.c.l.b16 %v123
    %v266 = vunpack.c.h.b16 %v123
    %v267 = vunpack.c.l.b16 %v124
    %v268 = vunpack.c.h.b16 %v124
    %v269 = vunpack.c.l.b16 %v125
    %v270 = vunpack.c.h.b16 %v125
    %v271 = vunpack.c.l.b16 %v126
    %v272 = vunpack.c.h.b16 %v126
    %v273 = vunpack.c.l.b16 %v127
    %v274 = vunpack.c.h.b16 %v127
    %v275 = vunpack.c.l.b16 %v128
    %v276 = vunpack.c.h.b16 %v128
    %v277 = vunpack.c.l.b16 %v129
    %v278 = vunpack.c.h.b16 %v129
    %v279 = vunpack.c.l.b16 %v130
    %v280 = vunpack.c.h.b16 %v130
    %v281 = vunpack.c.l.b16 %v131
    %v282 = vunpack.c.h.b16 %v131
    %v283 = vunpack.c.l.b16 %v132
    %v284 = vunpack.c.h.b16 %v132
    %v285 = vunpack.c.l.b16 %v133
    %v286 = vunpack.c.h.b16 %v133
    %v287 = vunpack.c.l.b16 %v134
    %v288 = vunpack.c.h.b16 %v134
    %v289 = vpack.c.b16 %v229, %v225
    %v290 = vpack.c.b16 %v230, %v226
    %v291 = vpack.c.b16 %v231, %v227
    %v292 = vpack.c.b16 %v232, %v228
    %v293 = vpack.c.b16 %v237, %v233
    %v294 = vpack.c.b16 %v238, %v234
    %v295 = vpack.c.b16 %v239, %v235
    %v296 = vpack.c.b16 %v240, %v236
    %v297 = vpack.c.b16 %v245, %v241
    %v298 = vpack.c.b16 %v246, %v242
    %v299 = vpack.c.b16 %v247, %v243
    %v300 = vpack.c.b16 %v248, %v244
    %v301 = vpack.c.b16 %v253, %v249
    %v302 = vpack.c.b16 %v254, %v250
    %v303 = vpack.c.b16 %v255, %v251
    %v304 = vpack.c.b16 %v256, %v252
    %v305 = vpack.c.b16 %v261, %v257
    %v306 = vpack.c.b16 %v262, %v258
    %v307 = vpack.c.b16 %v263, %v259
    %v308 = vpack.c.b16 %v264, %v260
    %v309 = vpack.c.b16 %v269, %v265
    %v310 = vpack.c.b16 %v270, %v266
    %v311 = vpack.c.b16 %v271, %v267
    %v312 = vpack.c.b16 %v272, %v268
    %v313 = vpack.c.b16 %v277, %v273
    %v314 = vpack.c.b16 %v278, %v274
    %v315 = vpack.c.b16 %v279, %v275
    %v316 = vpack.c.b16 %v280, %v276
    %v317 = vpack.c.b16 %v285, %v281
    %v318 = vpack.c.b16 %v286, %v282
    %v319 = vpack.c.b16 %v287, %v283
    %v320 = vpack.c.b16 %v288, %v284
    %353 = vmatpush.bf16.msra.mxu0 %v317
    %354 = vmatpush.bf16.msra.mxu0 %v313
    %355 = vmatpush.bf16.msra.mxu0 %v309
    %356 = vmatpush.bf16.msra.mxu0 %v305
    %357 = vmatpush.bf16.msra.mxu0 %v301
    %358 = vmatpush.bf16.msra.mxu0 %v297
    %359 = vmatpush.bf16.msra.mxu0 %v293
    %360 = vmatpush.bf16.msra.mxu0 %v289
    %361 = vmatmul.bf16.gmra.mxu0 %v177
    %v362 = vpop.f32.mrf.mxu0
    %v363 = vadd.f32 %v137, %v362
    %v364 = vpop.f32.mrf.mxu0
    %v365 = vadd.f32 %v137, %v364
    %366 = vmatmul.bf16.gmra.mxu0 %v178
    %v367 = vpop.f32.mrf.mxu0
    %v368 = vadd.f32 %v137, %v367
    %v369 = vpop.f32.mrf.mxu0
    %v370 = vadd.f32 %v137, %v369
    %371 = vmatmul.bf16.gmra.mxu0 %v179
    %v372 = vpop.f32.mrf.mxu0
    %v373 = vadd.f32 %v137, %v372
    %v374 = vpop.f32.mrf.mxu0
    %v375 = vadd.f32 %v137, %v374
    %376 = vmatmul.bf16.gmra.mxu0 %v180
    %v377 = vpop.f32.mrf.mxu0
    %v378 = vadd.f32 %v137, %v377
    %v379 = vpop.f32.mrf.mxu0
    %v380 = vadd.f32 %v137, %v379
    %381 = vmatmul.bf16.gmra.mxu0 %v181
    %v382 = vpop.f32.mrf.mxu0
    %v383 = vadd.f32 %v137, %v382
    %v384 = vpop.f32.mrf.mxu0
    %v385 = vadd.f32 %v137, %v384
    %386 = vmatmul.bf16.gmra.mxu0 %v182
    %v387 = vpop.f32.mrf.mxu0
    %v388 = vadd.f32 %v137, %v387
    %v389 = vpop.f32.mrf.mxu0
    %v390 = vadd.f32 %v137, %v389
    %391 = vmatmul.bf16.gmra.mxu0 %v183
    %v392 = vpop.f32.mrf.mxu0
    %v393 = vadd.f32 %v137, %v392
    %v394 = vpop.f32.mrf.mxu0
    %v395 = vadd.f32 %v137, %v394
    %396 = vmatmul.bf16.gmra.mxu0 %v184
    %v397 = vpop.f32.mrf.mxu0
    %v398 = vadd.f32 %v137, %v397
    %v399 = vpop.f32.mrf.mxu0
    %v400 = vadd.f32 %v137, %v399
    %401 = vdwg.mxu0
    %402 = vmatpush.bf16.msra.mxu0 %v318
    %403 = vmatpush.bf16.msra.mxu0 %v314
    %404 = vmatpush.bf16.msra.mxu0 %v310
    %405 = vmatpush.bf16.msra.mxu0 %v306
    %406 = vmatpush.bf16.msra.mxu0 %v302
    %407 = vmatpush.bf16.msra.mxu0 %v298
    %408 = vmatpush.bf16.msra.mxu0 %v294
    %409 = vmatpush.bf16.msra.mxu0 %v290
    %410 = vmatmul.bf16.gmra.mxu0 %v177
    %v411 = vpop.f32.mrf.mxu0
    %v412 = vadd.f32 %v138, %v411
    %v413 = vpop.f32.mrf.mxu0
    %v414 = vadd.f32 %v138, %v413
    %415 = vmatmul.bf16.gmra.mxu0 %v178
    %v416 = vpop.f32.mrf.mxu0
    %v417 = vadd.f32 %v138, %v416
    %v418 = vpop.f32.mrf.mxu0
    %v419 = vadd.f32 %v138, %v418
    %420 = vmatmul.bf16.gmra.mxu0 %v179
    %v421 = vpop.f32.mrf.mxu0
    %v422 = vadd.f32 %v138, %v421
    %v423 = vpop.f32.mrf.mxu0
    %v424 = vadd.f32 %v138, %v423
    %425 = vmatmul.bf16.gmra.mxu0 %v180
    %v426 = vpop.f32.mrf.mxu0
    %v427 = vadd.f32 %v138, %v426
    %v428 = vpop.f32.mrf.mxu0
    %v429 = vadd.f32 %v138, %v428
    %430 = vmatmul.bf16.gmra.mxu0 %v181
    %v431 = vpop.f32.mrf.mxu0
    %v432 = vadd.f32 %v138, %v431
    %v433 = vpop.f32.mrf.mxu0
    %v434 = vadd.f32 %v138, %v433
    %435 = vmatmul.bf16.gmra.mxu0 %v182
    %v436 = vpop.f32.mrf.mxu0
    %v437 = vadd.f32 %v138, %v436
    %v438 = vpop.f32.mrf.mxu0
    %v439 = vadd.f32 %v138, %v438
    %440 = vmatmul.bf16.gmra.mxu0 %v183
    %v441 = vpop.f32.mrf.mxu0
    %v442 = vadd.f32 %v138, %v441
    %v443 = vpop.f32.mrf.mxu0
    %v444 = vadd.f32 %v138, %v443
    %445 = vmatmul.bf16.gmra.mxu0 %v184
    %v446 = vpop.f32.mrf.mxu0
    %v447 = vadd.f32 %v138, %v446
    %v448 = vpop.f32.mrf.mxu0
    %v449 = vadd.f32 %v138, %v448
    %450 = vdwg.mxu0
    %451 = vmatpush.bf16.msra.mxu0 %v319
    %452 = vmatpush.bf16.msra.mxu0 %v315
    %453 = vmatpush.bf16.msra.mxu0 %v311
    %454 = vmatpush.bf16.msra.mxu0 %v307
    %455 = vmatpush.bf16.msra.mxu0 %v303
    %456 = vmatpush.bf16.msra.mxu0 %v299
    %457 = vmatpush.bf16.msra.mxu0 %v295
    %458 = vmatpush.bf16.msra.mxu0 %v291
    %459 = vmatmul.bf16.gmra.mxu0 %v177
    %v460 = vpop.f32.mrf.mxu0
    %v461 = vadd.f32 %v139, %v460
    %v462 = vpop.f32.mrf.mxu0
    %v463 = vadd.f32 %v139, %v462
    %464 = vmatmul.bf16.gmra.mxu0 %v178
    %v465 = vpop.f32.mrf.mxu0
    %v466 = vadd.f32 %v139, %v465
    %v467 = vpop.f32.mrf.mxu0
    %v468 = vadd.f32 %v139, %v467
    %469 = vmatmul.bf16.gmra.mxu0 %v179
    %v470 = vpop.f32.mrf.mxu0
    %v471 = vadd.f32 %v139, %v470
    %v472 = vpop.f32.mrf.mxu0
    %v473 = vadd.f32 %v139, %v472
    %474 = vmatmul.bf16.gmra.mxu0 %v180
    %v475 = vpop.f32.mrf.mxu0
    %v476 = vadd.f32 %v139, %v475
    %v477 = vpop.f32.mrf.mxu0
    %v478 = vadd.f32 %v139, %v477
    %479 = vmatmul.bf16.gmra.mxu0 %v181
    %v480 = vpop.f32.mrf.mxu0
    %v481 = vadd.f32 %v139, %v480
    %v482 = vpop.f32.mrf.mxu0
    %v483 = vadd.f32 %v139, %v482
    %484 = vmatmul.bf16.gmra.mxu0 %v182
    %v485 = vpop.f32.mrf.mxu0
    %v486 = vadd.f32 %v139, %v485
    %v487 = vpop.f32.mrf.mxu0
    %v488 = vadd.f32 %v139, %v487
    %489 = vmatmul.bf16.gmra.mxu0 %v183
    %v490 = vpop.f32.mrf.mxu0
    %v491 = vadd.f32 %v139, %v490
    %v492 = vpop.f32.mrf.mxu0
    %v493 = vadd.f32 %v139, %v492
    %494 = vmatmul.bf16.gmra.mxu0 %v184
    %v495 = vpop.f32.mrf.mxu0
    %v496 = vadd.f32 %v139, %v495
    %v497 = vpop.f32.mrf.mxu0
    %v498 = vadd.f32 %v139, %v497
    %499 = vdwg.mxu0
    %500 = vmatpush.bf16.msra.mxu0 %v320
    %501 = vmatpush.bf16.msra.mxu0 %v316
    %502 = vmatpush.bf16.msra.mxu0 %v312
    %503 = vmatpush.bf16.msra.mxu0 %v308
    %504 = vmatpush.bf16.msra.mxu0 %v304
    %505 = vmatpush.bf16.msra.mxu0 %v300
    %506 = vmatpush.bf16.msra.mxu0 %v296
    %507 = vmatpush.bf16.msra.mxu0 %v292
    %508 = vmatmul.bf16.gmra.mxu0 %v177
    %v509 = vpop.f32.mrf.mxu0
    %v510 = vadd.f32 %v140, %v509
    %v511 = vpop.f32.mrf.mxu0
    %v512 = vadd.f32 %v140, %v511
    %513 = vmatmul.bf16.gmra.mxu0 %v178
    %v514 = vpop.f32.mrf.mxu0
    %v515 = vadd.f32 %v140, %v514
    %v516 = vpop.f32.mrf.mxu0
    %v517 = vadd.f32 %v140, %v516
    %518 = vmatmul.bf16.gmra.mxu0 %v179
    %v519 = vpop.f32.mrf.mxu0
    %v520 = vadd.f32 %v140, %v519
    %v521 = vpop.f32.mrf.mxu0
    %v522 = vadd.f32 %v140, %v521
    %523 = vmatmul.bf16.gmra.mxu0 %v180
    %v524 = vpop.f32.mrf.mxu0
    %v525 = vadd.f32 %v140, %v524
    %v526 = vpop.f32.mrf.mxu0
    %v527 = vadd.f32 %v140, %v526
    %528 = vmatmul.bf16.gmra.mxu0 %v181
    %v529 = vpop.f32.mrf.mxu0
    %v530 = vadd.f32 %v140, %v529
    %v531 = vpop.f32.mrf.mxu0
    %v532 = vadd.f32 %v140, %v531
    %533 = vmatmul.bf16.gmra.mxu0 %v182
    %v534 = vpop.f32.mrf.mxu0
    %v535 = vadd.f32 %v140, %v534
    %v536 = vpop.f32.mrf.mxu0
    %v537 = vadd.f32 %v140, %v536
    %538 = vmatmul.bf16.gmra.mxu0 %v183
    %v539 = vpop.f32.mrf.mxu0
    %v540 = vadd.f32 %v140, %v539
    %v541 = vpop.f32.mrf.mxu0
    %v542 = vadd.f32 %v140, %v541
    %543 = vmatmul.bf16.gmra.mxu0 %v184
    %v544 = vpop.f32.mrf.mxu0
    %v545 = vadd.f32 %v140, %v544
    %v546 = vpop.f32.mrf.mxu0
    %v547 = vadd.f32 %v140, %v546
    %548 = vdwg.mxu0
    %549 = vst [vmem:[#allocation3] sm:$0xff] %v363
    %550 = vst [vmem:[#allocation3 + $0x8] sm:$0xff] %v412
    %551 = vst [vmem:[#allocation3 + $0x10] sm:$0xff] %v461
    %552 = vst [vmem:[#allocation3 + $0x18] sm:$0xff] %v510
    %553 = vst [vmem:[#allocation3 + $0x20] sm:$0xff] %v365
    %554 = vst [vmem:[#allocation3 + $0x28] sm:$0xff] %v414
    %555 = vst [vmem:[#allocation3 + $0x30] sm:$0xff] %v463
    %556 = vst [vmem:[#allocation3 + $0x38] sm:$0xff] %v512
    %557 = vst [vmem:[#allocation3 + $0x40] sm:$0xff] %v368
    %558 = vst [vmem:[#allocation3 + $0x48] sm:$0xff] %v417
    %559 = vst [vmem:[#allocation3 + $0x50] sm:$0xff] %v466
    %560 = vst [vmem:[#allocation3 + $0x58] sm:$0xff] %v515
    %561 = vst [vmem:[#allocation3 + $0x60] sm:$0xff] %v370
    %562 = vst [vmem:[#allocation3 + $0x68] sm:$0xff] %v419
    %563 = vst [vmem:[#allocation3 + $0x70] sm:$0xff] %v468
    %564 = vst [vmem:[#allocation3 + $0x78] sm:$0xff] %v517
    %565 = vst [vmem:[#allocation3 + $0x80] sm:$0xff] %v373
    %566 = vst [vmem:[#allocation3 + $0x88] sm:$0xff] %v422
    %567 = vst [vmem:[#allocation3 + $0x90] sm:$0xff] %v471
    %568 = vst [vmem:[#allocation3 + $0x98] sm:$0xff] %v520
    %569 = vst [vmem:[#allocation3 + $0xa0] sm:$0xff] %v375
    %570 = vst [vmem:[#allocation3 + $0xa8] sm:$0xff] %v424
    %571 = vst [vmem:[#allocation3 + $0xb0] sm:$0xff] %v473
    %572 = vst [vmem:[#allocation3 + $0xb8] sm:$0xff] %v522
    %573 = vst [vmem:[#allocation3 + $0xc0] sm:$0xff] %v378
    %574 = vst [vmem:[#allocation3 + $0xc8] sm:$0xff] %v427
    %575 = vst [vmem:[#allocation3 + $0xd0] sm:$0xff] %v476
    %576 = vst [vmem:[#allocation3 + $0xd8] sm:$0xff] %v525
    %577 = vst [vmem:[#allocation3 + $0xe0] sm:$0xff] %v380
    %578 = vst [vmem:[#allocation3 + $0xe8] sm:$0xff] %v429
    %579 = vst [vmem:[#allocation3 + $0xf0] sm:$0xff] %v478
    %580 = vst [vmem:[#allocation3 + $0xf8] sm:$0xff] %v527
    %581 = vst [vmem:[#allocation3 + $0x100] sm:$0xff] %v383
    %582 = vst [vmem:[#allocation3 + $0x108] sm:$0xff] %v432
    %583 = vst [vmem:[#allocation3 + $0x110] sm:$0xff] %v481
    %584 = vst [vmem:[#allocation3 + $0x118] sm:$0xff] %v530
    %585 = vst [vmem:[#allocation3 + $0x120] sm:$0xff] %v385
    %586 = vst [vmem:[#allocation3 + $0x128] sm:$0xff] %v434
    %587 = vst [vmem:[#allocation3 + $0x130] sm:$0xff] %v483
    %588 = vst [vmem:[#allocation3 + $0x138] sm:$0xff] %v532
    %589 = vst [vmem:[#allocation3 + $0x140] sm:$0xff] %v388
    %590 = vst [vmem:[#allocation3 + $0x148] sm:$0xff] %v437
    %591 = vst [vmem:[#allocation3 + $0x150] sm:$0xff] %v486
    %592 = vst [vmem:[#allocation3 + $0x158] sm:$0xff] %v535
    %593 = vst [vmem:[#allocation3 + $0x160] sm:$0xff] %v390
    %594 = vst [vmem:[#allocation3 + $0x168] sm:$0xff] %v439
    %595 = vst [vmem:[#allocation3 + $0x170] sm:$0xff] %v488
    %596 = vst [vmem:[#allocation3 + $0x178] sm:$0xff] %v537
    %597 = vst [vmem:[#allocation3 + $0x180] sm:$0xff] %v393
    %598 = vst [vmem:[#allocation3 + $0x188] sm:$0xff] %v442
    %599 = vst [vmem:[#allocation3 + $0x190] sm:$0xff] %v491
    %600 = vst [vmem:[#allocation3 + $0x198] sm:$0xff] %v540
    %601 = vst [vmem:[#allocation3 + $0x1a0] sm:$0xff] %v395
    %602 = vst [vmem:[#allocation3 + $0x1a8] sm:$0xff] %v444
    %603 = vst [vmem:[#allocation3 + $0x1b0] sm:$0xff] %v493
    %604 = vst [vmem:[#allocation3 + $0x1b8] sm:$0xff] %v542
    %605 = vst [vmem:[#allocation3 + $0x1c0] sm:$0xff] %v398
    %606 = vst [vmem:[#allocation3 + $0x1c8] sm:$0xff] %v447
    %607 = vst [vmem:[#allocation3 + $0x1d0] sm:$0xff] %v496
    %608 = vst [vmem:[#allocation3 + $0x1d8] sm:$0xff] %v545
    %609 = vst [vmem:[#allocation3 + $0x1e0] sm:$0xff] %v400
    %610 = vst [vmem:[#allocation3 + $0x1e8] sm:$0xff] %v449
    %611 = vst [vmem:[#allocation3 + $0x1f0] sm:$0xff] %v498
    %612 = vst [vmem:[#allocation3 + $0x1f8] sm:$0xff] %v547
    %v613 = vld [vmem:[#allocation9] sm:$0xff]
    %v614 = vld [vmem:[#allocation9 + $0x8] sm:$0xff]
    %v615 = vld [vmem:[#allocation9 + $0x10] sm:$0xff]
    %v616 = vld [vmem:[#allocation9 + $0x18] sm:$0xff]
    %v617 = vld [vmem:[#allocation9 + $0x20] sm:$0xff]
    %v618 = vld [vmem:[#allocation9 + $0x28] sm:$0xff]
    %v619 = vld [vmem:[#allocation9 + $0x30] sm:$0xff]
    %v620 = vld [vmem:[#allocation9 + $0x38] sm:$0xff]
    %v621 = vld [vmem:[#allocation9 + $0x40] sm:$0xff]
    %v622 = vld [vmem:[#allocation9 + $0x48] sm:$0xff]
    %v623 = vld [vmem:[#allocation9 + $0x50] sm:$0xff]
    %v624 = vld [vmem:[#allocation9 + $0x58] sm:$0xff]
    %v625 = vld [vmem:[#allocation9 + $0x60] sm:$0xff]
    %v626 = vld [vmem:[#allocation9 + $0x68] sm:$0xff]
    %v627 = vld [vmem:[#allocation9 + $0x70] sm:$0xff]
    %v628 = vld [vmem:[#allocation9 + $0x78] sm:$0xff]
    %v629 = vld [vmem:[#allocation9 + $0x80] sm:$0xff]
    %v630 = vld [vmem:[#allocation9 + $0x88] sm:$0xff]
    %v631 = vld [vmem:[#allocation9 + $0x90] sm:$0xff]
    %v632 = vld [vmem:[#allocation9 + $0x98] sm:$0xff]
    %v633 = vld [vmem:[#allocation9 + $0xa0] sm:$0xff]
    %v634 = vld [vmem:[#allocation9 + $0xa8] sm:$0xff]
    %v635 = vld [vmem:[#allocation9 + $0xb0] sm:$0xff]
    %v636 = vld [vmem:[#allocation9 + $0xb8] sm:$0xff]
    %v637 = vld [vmem:[#allocation9 + $0xc0] sm:$0xff]
    %v638 = vld [vmem:[#allocation9 + $0xc8] sm:$0xff]
    %v639 = vld [vmem:[#allocation9 + $0xd0] sm:$0xff]
    %v640 = vld [vmem:[#allocation9 + $0xd8] sm:$0xff]
    %v641 = vld [vmem:[#allocation9 + $0xe0] sm:$0xff]
    %v642 = vld [vmem:[#allocation9 + $0xe8] sm:$0xff]
    %v643 = vld [vmem:[#allocation9 + $0xf0] sm:$0xff]
    %v644 = vld [vmem:[#allocation9 + $0xf8] sm:$0xff]
    %v645 = vld [vmem:[#allocation12] sm:$0xff]
    %v646 = vld [vmem:[#allocation12 + $0x8] sm:$0xff]
    %v647 = vld [vmem:[#allocation2] sm:$0xff]
    %v648 = vld [vmem:[#allocation2 + $0x8] sm:$0xff]
    %s649 = smul.u32 0, 4
    %s650 = smul.addr %s649, 8
    %s651 = scalar_lea.vmem [#allocation3], %s650
    %v652 = vld [vmem:[%s651] sm:$0xff]
    %v653 = vld [vmem:[%s651 + $0x8] sm:$0xff]
    %v654 = vld [vmem:[%s651 + $0x10] sm:$0xff]
    %v655 = vld [vmem:[%s651 + $0x18] sm:$0xff]
    %v656 = vld [vmem:[%s651 + $0x20] sm:$0xff]
    %v657 = vld [vmem:[%s651 + $0x28] sm:$0xff]
    %v658 = vld [vmem:[%s651 + $0x30] sm:$0xff]
    %v659 = vld [vmem:[%s651 + $0x38] sm:$0xff]
    %v660 = vpack.c.bf16 %v646, %v645
    %v693 = vunpack.c.l.b16 %v613
    %v694 = vunpack.c.h.b16 %v613
    %v695 = vunpack.c.l.b16 %v614
    %v696 = vunpack.c.h.b16 %v614
    %v697 = vunpack.c.l.b16 %v615
    %v698 = vunpack.c.h.b16 %v615
    %v699 = vunpack.c.l.b16 %v616
    %v700 = vunpack.c.h.b16 %v616
    %v701 = vunpack.c.l.b16 %v617
    %v702 = vunpack.c.h.b16 %v617
    %v703 = vunpack.c.l.b16 %v618
    %v704 = vunpack.c.h.b16 %v618
    %v705 = vunpack.c.l.b16 %v619
    %v706 = vunpack.c.h.b16 %v619
    %v707 = vunpack.c.l.b16 %v620
    %v708 = vunpack.c.h.b16 %v620
    %v709 = vunpack.c.l.b16 %v621
    %v710 = vunpack.c.h.b16 %v621
    %v711 = vunpack.c.l.b16 %v622
    %v712 = vunpack.c.h.b16 %v622
    %v713 = vunpack.c.l.b16 %v623
    %v714 = vunpack.c.h.b16 %v623
    %v715 = vunpack.c.l.b16 %v624
    %v716 = vunpack.c.h.b16 %v624
    %v717 = vunpack.c.l.b16 %v625
    %v718 = vunpack.c.h.b16 %v625
    %v719 = vunpack.c.l.b16 %v626
    %v720 = vunpack.c.h.b16 %v626
    %v721 = vunpack.c.l.b16 %v627
    %v722 = vunpack.c.h.b16 %v627
    %v723 = vunpack.c.l.b16 %v628
    %v724 = vunpack.c.h.b16 %v628
    %v725 = vunpack.c.l.b16 %v629
    %v726 = vunpack.c.h.b16 %v629
    %v727 = vunpack.c.l.b16 %v630
    %v728 = vunpack.c.h.b16 %v630
    %v729 = vunpack.c.l.b16 %v631
    %v730 = vunpack.c.h.b16 %v631
    %v731 = vunpack.c.l.b16 %v632
    %v732 = vunpack.c.h.b16 %v632
    %v733 = vunpack.c.l.b16 %v633
    %v734 = vunpack.c.h.b16 %v633
    %v735 = vunpack.c.l.b16 %v634
    %v736 = vunpack.c.h.b16 %v634
    %v737 = vunpack.c.l.b16 %v635
    %v738 = vunpack.c.h.b16 %v635
    %v739 = vunpack.c.l.b16 %v636
    %v740 = vunpack.c.h.b16 %v636
    %v741 = vunpack.c.l.b16 %v637
    %v742 = vunpack.c.h.b16 %v637
    %v743 = vunpack.c.l.b16 %v638
    %v744 = vunpack.c.h.b16 %v638
    %v745 = vunpack.c.l.b16 %v639
    %v746 = vunpack.c.h.b16 %v639
    %v747 = vunpack.c.l.b16 %v640
    %v748 = vunpack.c.h.b16 %v640
    %v749 = vunpack.c.l.b16 %v641
    %v750 = vunpack.c.h.b16 %v641
    %v751 = vunpack.c.l.b16 %v642
    %v752 = vunpack.c.h.b16 %v642
    %v753 = vunpack.c.l.b16 %v643
    %v754 = vunpack.c.h.b16 %v643
    %v755 = vunpack.c.l.b16 %v644
    %v756 = vunpack.c.h.b16 %v644
    %v757 = vpack.c.b16 %v697, %v693
    %v758 = vpack.c.b16 %v698, %v694
    %v759 = vpack.c.b16 %v699, %v695
    %v760 = vpack.c.b16 %v700, %v696
    %v761 = vpack.c.b16 %v705, %v701
    %v762 = vpack.c.b16 %v706, %v702
    %v763 = vpack.c.b16 %v707, %v703
    %v764 = vpack.c.b16 %v708, %v704
    %v765 = vpack.c.b16 %v713, %v709
    %v766 = vpack.c.b16 %v714, %v710
    %v767 = vpack.c.b16 %v715, %v711
    %v768 = vpack.c.b16 %v716, %v712
    %v769 = vpack.c.b16 %v721, %v717
    %v770 = vpack.c.b16 %v722, %v718
    %v771 = vpack.c.b16 %v723, %v719
    %v772 = vpack.c.b16 %v724, %v720
    %v773 = vpack.c.b16 %v729, %v725
    %v774 = vpack.c.b16 %v730, %v726
    %v775 = vpack.c.b16 %v731, %v727
    %v776 = vpack.c.b16 %v732, %v728
    %v777 = vpack.c.b16 %v737, %v733
    %v778 = vpack.c.b16 %v738, %v734
    %v779 = vpack.c.b16 %v739, %v735
    %v780 = vpack.c.b16 %v740, %v736
    %v781 = vpack.c.b16 %v745, %v741
    %v782 = vpack.c.b16 %v746, %v742
    %v783 = vpack.c.b16 %v747, %v743
    %v784 = vpack.c.b16 %v748, %v744
    %v785 = vpack.c.b16 %v753, %v749
    %v786 = vpack.c.b16 %v754, %v750
    %v787 = vpack.c.b16 %v755, %v751
    %v788 = vpack.c.b16 %v756, %v752
    %821 = vmatpush.bf16.msra.mxu0 %v785
    %822 = vmatpush.bf16.msra.mxu0 %v781
    %823 = vmatpush.bf16.msra.mxu0 %v777
    %824 = vmatpush.bf16.msra.mxu0 %v773
    %825 = vmatpush.bf16.msra.mxu0 %v769
    %826 = vmatpush.bf16.msra.mxu0 %v765
    %827 = vmatpush.bf16.msra.mxu0 %v761
    %828 = vmatpush.bf16.msra.mxu0 %v757
    %829 = vmatmul.bf16.gmra.mxu0 %v660
    %v830 = vpop.f32.mrf.mxu0
    %v831 = vadd.f32 0.0, %v830
    %v832 = vpop.f32.mrf.mxu0
    %v833 = vadd.f32 0.0, %v832
    %834 = vdwg.mxu0
    %835 = vmatpush.bf16.msra.mxu0 %v786
    %836 = vmatpush.bf16.msra.mxu0 %v782
    %837 = vmatpush.bf16.msra.mxu0 %v778
    %838 = vmatpush.bf16.msra.mxu0 %v774
    %839 = vmatpush.bf16.msra.mxu0 %v770
    %840 = vmatpush.bf16.msra.mxu0 %v766
    %841 = vmatpush.bf16.msra.mxu0 %v762
    %842 = vmatpush.bf16.msra.mxu0 %v758
    %843 = vmatmul.bf16.gmra.mxu0 %v660
    %v844 = vpop.f32.mrf.mxu0
    %v845 = vadd.f32 0.0, %v844
    %v846 = vpop.f32.mrf.mxu0
    %v847 = vadd.f32 0.0, %v846
    %848 = vdwg.mxu0
    %849 = vmatpush.bf16.msra.mxu0 %v787
    %850 = vmatpush.bf16.msra.mxu0 %v783
    %851 = vmatpush.bf16.msra.mxu0 %v779
    %852 = vmatpush.bf16.msra.mxu0 %v775
    %853 = vmatpush.bf16.msra.mxu0 %v771
    %854 = vmatpush.bf16.msra.mxu0 %v767
    %855 = vmatpush.bf16.msra.mxu0 %v763
    %856 = vmatpush.bf16.msra.mxu0 %v759
    %857 = vmatmul.bf16.gmra.mxu0 %v660
    %v858 = vpop.f32.mrf.mxu0
    %v859 = vadd.f32 0.0, %v858
    %v860 = vpop.f32.mrf.mxu0
    %v861 = vadd.f32 0.0, %v860
    %862 = vdwg.mxu0
    %863 = vmatpush.bf16.msra.mxu0 %v788
    %864 = vmatpush.bf16.msra.mxu0 %v784
    %865 = vmatpush.bf16.msra.mxu0 %v780
    %866 = vmatpush.bf16.msra.mxu0 %v776
    %867 = vmatpush.bf16.msra.mxu0 %v772
    %868 = vmatpush.bf16.msra.mxu0 %v768
    %869 = vmatpush.bf16.msra.mxu0 %v764
    %870 = vmatpush.bf16.msra.mxu0 %v760
    %871 = vmatmul.bf16.gmra.mxu0 %v660
    %v872 = vpop.f32.mrf.mxu0
    %v873 = vadd.f32 0.0, %v872
    %v874 = vpop.f32.mrf.mxu0
    %v875 = vadd.f32 0.0, %v874
    %876 = vdwg.mxu0
    %v877 = vadd.f32 %v652, %v831
    %v878 = vadd.f32 %v653, %v845
    %v879 = vadd.f32 %v654, %v859
    %v880 = vadd.f32 %v655, %v873
    %v881 = vadd.f32 %v656, %v833
    %v882 = vadd.f32 %v657, %v847
    %v883 = vadd.f32 %v658, %v861
    %v884 = vadd.f32 %v659, %v875
    %v885 = vxor.u32 %v877, 2147483648
    %v886 = vxor.u32 %v881, 2147483648
    %v887 = vmul.f32 %v885, 1.442695
    %v888 = vpow.pop %v887
    %v889 = vmul.f32 %v886, 1.442695
    %v890 = vpow.pop %v889
    %v891 = vadd.f32 %v888, 1.0
    %v892 = vadd.f32 %v890, 1.0
    %v893 = vrcp.pop %v891
    %v894 = vmul.f32 %v891, %v893
    %v895 = vsub.f32 1.0, %v894
    %v896 = vmul.f32 %v893, %v895
    %v897 = vadd.f32 %v893, %v896
    %vm898 = vweird.f32 %v891
    %vm899 = vweird.f32 %v893
    %vm900 = vmor %vm898, %vm899
    %v901 = vsel %vm900, %v893, %v897
    %v902 = vand.u32 2147483647, %v891
    %vm903 = vcmp.eq.f32.partialorder %v902, 8.507059e+37
    %v904 = vand.u32 %v891, 2147483648
    %v905 = vor.u32 1.1754944e-38, %v904
    %v906 = vsel %vm903, %v905, %v901
    %v907 = vmul.f32 1.0, %v906
    %v908 = vrcp.pop %v892
    %v909 = vmul.f32 %v892, %v908
    %v910 = vsub.f32 1.0, %v909
    %v911 = vmul.f32 %v908, %v910
    %v912 = vadd.f32 %v908, %v911
    %vm913 = vweird.f32 %v892
    %vm914 = vweird.f32 %v908
    %vm915 = vmor %vm913, %vm914
    %v916 = vsel %vm915, %v908, %v912
    %v917 = vand.u32 2147483647, %v892
    %vm918 = vcmp.eq.f32.partialorder %v917, 8.507059e+37
    %v919 = vand.u32 %v892, 2147483648
    %v920 = vor.u32 1.1754944e-38, %v919
    %v921 = vsel %vm918, %v920, %v916
    %v922 = vmul.f32 1.0, %v921
    %v923 = vxor.u32 %v878, 2147483648
    %v924 = vxor.u32 %v882, 2147483648
    %v925 = vmul.f32 %v923, 1.442695
    %v926 = vpow.pop %v925
    %v927 = vmul.f32 %v924, 1.442695
    %v928 = vpow.pop %v927
    %v929 = vadd.f32 %v926, 1.0
    %v930 = vadd.f32 %v928, 1.0
    %v931 = vrcp.pop %v929
    %v932 = vmul.f32 %v929, %v931
    %v933 = vsub.f32 1.0, %v932
    %v934 = vmul.f32 %v931, %v933
    %v935 = vadd.f32 %v931, %v934
    %vm936 = vweird.f32 %v929
    %vm937 = vweird.f32 %v931
    %vm938 = vmor %vm936, %vm937
    %v939 = vsel %vm938, %v931, %v935
    %v940 = vand.u32 2147483647, %v929
    %vm941 = vcmp.eq.f32.partialorder %v940, 8.507059e+37
    %v942 = vand.u32 %v929, 2147483648
    %v943 = vor.u32 1.1754944e-38, %v942
    %v944 = vsel %vm941, %v943, %v939
    %v945 = vmul.f32 1.0, %v944
    %v946 = vrcp.pop %v930
    %v947 = vmul.f32 %v930, %v946
    %v948 = vsub.f32 1.0, %v947
    %v949 = vmul.f32 %v946, %v948
    %v950 = vadd.f32 %v946, %v949
    %vm951 = vweird.f32 %v930
    %vm952 = vweird.f32 %v946
    %vm953 = vmor %vm951, %vm952
    %v954 = vsel %vm953, %v946, %v950
    %v955 = vand.u32 2147483647, %v930
    %vm956 = vcmp.eq.f32.partialorder %v955, 8.507059e+37
    %v957 = vand.u32 %v930, 2147483648
    %v958 = vor.u32 1.1754944e-38, %v957
    %v959 = vsel %vm956, %v958, %v954
    %v960 = vmul.f32 1.0, %v959
    %v961 = vtanh.pop %v879
    %v962 = vtanh.pop %v883
    %v963 = vxor.u32 %v880, 2147483648
    %v964 = vxor.u32 %v884, 2147483648
    %v965 = vmul.f32 %v963, 1.442695
    %v966 = vpow.pop %v965
    %v967 = vmul.f32 %v964, 1.442695
    %v968 = vpow.pop %v967
    %v969 = vadd.f32 %v966, 1.0
    %v970 = vadd.f32 %v968, 1.0
    %v971 = vrcp.pop %v969
    %v972 = vmul.f32 %v969, %v971
    %v973 = vsub.f32 1.0, %v972
    %v974 = vmul.f32 %v971, %v973
    %v975 = vadd.f32 %v971, %v974
    %vm976 = vweird.f32 %v969
    %vm977 = vweird.f32 %v971
    %vm978 = vmor %vm976, %vm977
    %v979 = vsel %vm978, %v971, %v975
    %v980 = vand.u32 2147483647, %v969
    %vm981 = vcmp.eq.f32.partialorder %v980, 8.507059e+37
    %v982 = vand.u32 %v969, 2147483648
    %v983 = vor.u32 1.1754944e-38, %v982
    %v984 = vsel %vm981, %v983, %v979
    %v985 = vmul.f32 1.0, %v984
    %v986 = vrcp.pop %v970
    %v987 = vmul.f32 %v970, %v986
    %v988 = vsub.f32 1.0, %v987
    %v989 = vmul.f32 %v986, %v988
    %v990 = vadd.f32 %v986, %v989
    %vm991 = vweird.f32 %v970
    %vm992 = vweird.f32 %v986
    %vm993 = vmor %vm991, %vm992
    %v994 = vsel %vm993, %v986, %v990
    %v995 = vand.u32 2147483647, %v970
    %vm996 = vcmp.eq.f32.partialorder %v995, 8.507059e+37
    %v997 = vand.u32 %v970, 2147483648
    %v998 = vor.u32 1.1754944e-38, %v997
    %v999 = vsel %vm996, %v998, %v994
    %v1000 = vmul.f32 1.0, %v999
    %v1001 = vmul.f32 %v945, %v647
    %v1002 = vmul.f32 %v960, %v648
    %v1003 = vmul.f32 %v907, %v961
    %v1004 = vmul.f32 %v922, %v962
    %v1005 = vadd.f32 %v1001, %v1003
    %v1006 = vadd.f32 %v1002, %v1004
    %v1007 = vtanh.pop %v1005
    %v1008 = vtanh.pop %v1006
    %v1009 = vmul.f32 %v985, %v1007
    %v1010 = vmul.f32 %v1000, %v1008
    %s1011 = smul.u32 2, 4
    %s1012 = smul.addr %s1011, 8
    %s1013 = scalar_lea.vmem [#allocation3], %s1012
    %v1014 = vld [vmem:[%s1013] sm:$0xff]
    %v1015 = vld [vmem:[%s1013 + $0x8] sm:$0xff]
    %v1016 = vld [vmem:[%s1013 + $0x10] sm:$0xff]
    %v1017 = vld [vmem:[%s1013 + $0x18] sm:$0xff]
    %v1018 = vld [vmem:[%s1013 + $0x20] sm:$0xff]
    %v1019 = vld [vmem:[%s1013 + $0x28] sm:$0xff]
    %v1020 = vld [vmem:[%s1013 + $0x30] sm:$0xff]
    %v1021 = vld [vmem:[%s1013 + $0x38] sm:$0xff]
    %v1022 = vpack.c.bf16 %v1010, %v1009
    %1023 = vmatpush.bf16.msra.mxu0 %v785
    %1024 = vmatpush.bf16.msra.mxu0 %v781
    %1025 = vmatpush.bf16.msra.mxu0 %v777
    %1026 = vmatpush.bf16.msra.mxu0 %v773
    %1027 = vmatpush.bf16.msra.mxu0 %v769
    %1028 = vmatpush.bf16.msra.mxu0 %v765
    %1029 = vmatpush.bf16.msra.mxu0 %v761
    %1030 = vmatpush.bf16.msra.mxu0 %v757
    %1031 = vmatmul.bf16.gmra.mxu0 %v1022
    %v1032 = vpop.f32.mrf.mxu0
    %v1033 = vadd.f32 0.0, %v1032
    %v1034 = vpop.f32.mrf.mxu0
    %v1035 = vadd.f32 0.0, %v1034
    %1036 = vdwg.mxu0
    %1037 = vmatpush.bf16.msra.mxu0 %v786
    %1038 = vmatpush.bf16.msra.mxu0 %v782
    %1039 = vmatpush.bf16.msra.mxu0 %v778
    %1040 = vmatpush.bf16.msra.mxu0 %v774
    %1041 = vmatpush.bf16.msra.mxu0 %v770
    %1042 = vmatpush.bf16.msra.mxu0 %v766
    %1043 = vmatpush.bf16.msra.mxu0 %v762
    %1044 = vmatpush.bf16.msra.mxu0 %v758
    %1045 = vmatmul.bf16.gmra.mxu0 %v1022
    %v1046 = vpop.f32.mrf.mxu0
    %v1047 = vadd.f32 0.0, %v1046
    %v1048 = vpop.f32.mrf.mxu0
    %v1049 = vadd.f32 0.0, %v1048
    %1050 = vdwg.mxu0
    %1051 = vmatpush.bf16.msra.mxu0 %v787
    %1052 = vmatpush.bf16.msra.mxu0 %v783
    %1053 = vmatpush.bf16.msra.mxu0 %v779
    %1054 = vmatpush.bf16.msra.mxu0 %v775
    %1055 = vmatpush.bf16.msra.mxu0 %v771
    %1056 = vmatpush.bf16.msra.mxu0 %v767
    %1057 = vmatpush.bf16.msra.mxu0 %v763
    %1058 = vmatpush.bf16.msra.mxu0 %v759
    %1059 = vmatmul.bf16.gmra.mxu0 %v1022
    %v1060 = vpop.f32.mrf.mxu0
    %v1061 = vadd.f32 0.0, %v1060
    %v1062 = vpop.f32.mrf.mxu0
    %v1063 = vadd.f32 0.0, %v1062
    %1064 = vdwg.mxu0
    %1065 = vmatpush.bf16.msra.mxu0 %v788
    %1066 = vmatpush.bf16.msra.mxu0 %v784
    %1067 = vmatpush.bf16.msra.mxu0 %v780
    %1068 = vmatpush.bf16.msra.mxu0 %v776
    %1069 = vmatpush.bf16.msra.mxu0 %v772
    %1070 = vmatpush.bf16.msra.mxu0 %v768
    %1071 = vmatpush.bf16.msra.mxu0 %v764
    %1072 = vmatpush.bf16.msra.mxu0 %v760
    %1073 = vmatmul.bf16.gmra.mxu0 %v1022
    %v1074 = vpop.f32.mrf.mxu0
    %v1075 = vadd.f32 0.0, %v1074
    %v1076 = vpop.f32.mrf.mxu0
    %v1077 = vadd.f32 0.0, %v1076
    %1078 = vdwg.mxu0
    %v1079 = vadd.f32 %v1014, %v1033
    %v1080 = vadd.f32 %v1015, %v1047
    %v1081 = vadd.f32 %v1016, %v1061
    %v1082 = vadd.f32 %v1017, %v1075
    %v1083 = vadd.f32 %v1018, %v1035
    %v1084 = vadd.f32 %v1019, %v1049
    %v1085 = vadd.f32 %v1020, %v1063
    %v1086 = vadd.f32 %v1021, %v1077
    %v1087 = vxor.u32 %v1079, 2147483648
    %v1088 = vxor.u32 %v1083, 2147483648
    %v1089 = vmul.f32 %v1087, 1.442695
    %v1090 = vpow.pop %v1089
    %v1091 = vmul.f32 %v1088, 1.442695
    %v1092 = vpow.pop %v1091
    %v1093 = vadd.f32 %v1090, 1.0
    %v1094 = vadd.f32 %v1092, 1.0
    %v1095 = vrcp.pop %v1093
    %v1096 = vmul.f32 %v1093, %v1095
    %v1097 = vsub.f32 1.0, %v1096
    %v1098 = vmul.f32 %v1095, %v1097
    %v1099 = vadd.f32 %v1095, %v1098
    %vm1100 = vweird.f32 %v1093
    %vm1101 = vweird.f32 %v1095
    %vm1102 = vmor %vm1100, %vm1101
    %v1103 = vsel %vm1102, %v1095, %v1099
    %v1104 = vand.u32 2147483647, %v1093
    %vm1105 = vcmp.eq.f32.partialorder %v1104, 8.507059e+37
    %v1106 = vand.u32 %v1093, 2147483648
    %v1107 = vor.u32 1.1754944e-38, %v1106
    %v1108 = vsel %vm1105, %v1107, %v1103
    %v1109 = vmul.f32 1.0, %v1108
    %v1110 = vrcp.pop %v1094
    %v1111 = vmul.f32 %v1094, %v1110
    %v1112 = vsub.f32 1.0, %v1111
    %v1113 = vmul.f32 %v1110, %v1112
    %v1114 = vadd.f32 %v1110, %v1113
    %vm1115 = vweird.f32 %v1094
    %vm1116 = vweird.f32 %v1110
    %vm1117 = vmor %vm1115, %vm1116
    %v1118 = vsel %vm1117, %v1110, %v1114
    %v1119 = vand.u32 2147483647, %v1094
    %vm1120 = vcmp.eq.f32.partialorder %v1119, 8.507059e+37
    %v1121 = vand.u32 %v1094, 2147483648
    %v1122 = vor.u32 1.1754944e-38, %v1121
    %v1123 = vsel %vm1120, %v1122, %v1118
    %v1124 = vmul.f32 1.0, %v1123
    %v1125 = vxor.u32 %v1080, 2147483648
    %v1126 = vxor.u32 %v1084, 2147483648
    %v1127 = vmul.f32 %v1125, 1.442695
    %v1128 = vpow.pop %v1127
    %v1129 = vmul.f32 %v1126, 1.442695
    %v1130 = vpow.pop %v1129
    %v1131 = vadd.f32 %v1128, 1.0
    %v1132 = vadd.f32 %v1130, 1.0
    %v1133 = vrcp.pop %v1131
    %v1134 = vmul.f32 %v1131, %v1133
    %v1135 = vsub.f32 1.0, %v1134
    %v1136 = vmul.f32 %v1133, %v1135
    %v1137 = vadd.f32 %v1133, %v1136
    %vm1138 = vweird.f32 %v1131
    %vm1139 = vweird.f32 %v1133
    %vm1140 = vmor %vm1138, %vm1139
    %v1141 = vsel %vm1140, %v1133, %v1137
    %v1142 = vand.u32 2147483647, %v1131
    %vm1143 = vcmp.eq.f32.partialorder %v1142, 8.507059e+37
    %v1144 = vand.u32 %v1131, 2147483648
    %v1145 = vor.u32 1.1754944e-38, %v1144
    %v1146 = vsel %vm1143, %v1145, %v1141
    %v1147 = vmul.f32 1.0, %v1146
    %v1148 = vrcp.pop %v1132
    %v1149 = vmul.f32 %v1132, %v1148
    %v1150 = vsub.f32 1.0, %v1149
    %v1151 = vmul.f32 %v1148, %v1150
    %v1152 = vadd.f32 %v1148, %v1151
    %vm1153 = vweird.f32 %v1132
    %vm1154 = vweird.f32 %v1148
    %vm1155 = vmor %vm1153, %vm1154
    %v1156 = vsel %vm1155, %v1148, %v1152
    %v1157 = vand.u32 2147483647, %v1132
    %vm1158 = vcmp.eq.f32.partialorder %v1157, 8.507059e+37
    %v1159 = vand.u32 %v1132, 2147483648
    %v1160 = vor.u32 1.1754944e-38, %v1159
    %v1161 = vsel %vm1158, %v1160, %v1156
    %v1162 = vmul.f32 1.0, %v1161
    %v1163 = vtanh.pop %v1081
    %v1164 = vtanh.pop %v1085
    %v1165 = vxor.u32 %v1082, 2147483648
    %v1166 = vxor.u32 %v1086, 2147483648
    %v1167 = vmul.f32 %v1165, 1.442695
    %v1168 = vpow.pop %v1167
    %v1169 = vmul.f32 %v1166, 1.442695
    %v1170 = vpow.pop %v1169
    %v1171 = vadd.f32 %v1168, 1.0
    %v1172 = vadd.f32 %v1170, 1.0
    %v1173 = vrcp.pop %v1171
    %v1174 = vmul.f32 %v1171, %v1173
    %v1175 = vsub.f32 1.0, %v1174
    %v1176 = vmul.f32 %v1173, %v1175
    %v1177 = vadd.f32 %v1173, %v1176
    %vm1178 = vweird.f32 %v1171
    %vm1179 = vweird.f32 %v1173
    %vm1180 = vmor %vm1178, %vm1179
    %v1181 = vsel %vm1180, %v1173, %v1177
    %v1182 = vand.u32 2147483647, %v1171
    %vm1183 = vcmp.eq.f32.partialorder %v1182, 8.507059e+37
    %v1184 = vand.u32 %v1171, 2147483648
    %v1185 = vor.u32 1.1754944e-38, %v1184
    %v1186 = vsel %vm1183, %v1185, %v1181
    %v1187 = vmul.f32 1.0, %v1186
    %v1188 = vrcp.pop %v1172
    %v1189 = vmul.f32 %v1172, %v1188
    %v1190 = vsub.f32 1.0, %v1189
    %v1191 = vmul.f32 %v1188, %v1190
    %v1192 = vadd.f32 %v1188, %v1191
    %vm1193 = vweird.f32 %v1172
    %vm1194 = vweird.f32 %v1188
    %vm1195 = vmor %vm1193, %vm1194
    %v1196 = vsel %vm1195, %v1188, %v1192
    %v1197 = vand.u32 2147483647, %v1172
    %vm1198 = vcmp.eq.f32.partialorder %v1197, 8.507059e+37
    %v1199 = vand.u32 %v1172, 2147483648
    %v1200 = vor.u32 1.1754944e-38, %v1199
    %v1201 = vsel %vm1198, %v1200, %v1196
    %v1202 = vmul.f32 1.0, %v1201
    %v1203 = vmul.f32 %v1147, %v1005
    %v1204 = vmul.f32 %v1162, %v1006
    %v1205 = vmul.f32 %v1109, %v1163
    %v1206 = vmul.f32 %v1124, %v1164
    %v1207 = vadd.f32 %v1203, %v1205
    %v1208 = vadd.f32 %v1204, %v1206
    %v1209 = vtanh.pop %v1207
    %v1210 = vtanh.pop %v1208
    %v1211 = vmul.f32 %v1187, %v1209
    %v1212 = vmul.f32 %v1202, %v1210
    %s1213 = smul.u32 4, 4
    %s1214 = smul.addr %s1213, 8
    %s1215 = scalar_lea.vmem [#allocation3], %s1214
    %v1216 = vld [vmem:[%s1215] sm:$0xff]
    %v1217 = vld [vmem:[%s1215 + $0x8] sm:$0xff]
    %v1218 = vld [vmem:[%s1215 + $0x10] sm:$0xff]
    %v1219 = vld [vmem:[%s1215 + $0x18] sm:$0xff]
    %v1220 = vld [vmem:[%s1215 + $0x20] sm:$0xff]
    %v1221 = vld [vmem:[%s1215 + $0x28] sm:$0xff]
    %v1222 = vld [vmem:[%s1215 + $0x30] sm:$0xff]
    %v1223 = vld [vmem:[%s1215 + $0x38] sm:$0xff]
    %v1224 = vpack.c.bf16 %v1212, %v1211
    %1225 = vmatpush.bf16.msra.mxu0 %v785
    %1226 = vmatpush.bf16.msra.mxu0 %v781
    %1227 = vmatpush.bf16.msra.mxu0 %v777
    %1228 = vmatpush.bf16.msra.mxu0 %v773
    %1229 = vmatpush.bf16.msra.mxu0 %v769
    %1230 = vmatpush.bf16.msra.mxu0 %v765
    %1231 = vmatpush.bf16.msra.mxu0 %v761
    %1232 = vmatpush.bf16.msra.mxu0 %v757
    %1233 = vmatmul.bf16.gmra.mxu0 %v1224
    %v1234 = vpop.f32.mrf.mxu0
    %v1235 = vadd.f32 0.0, %v1234
    %v1236 = vpop.f32.mrf.mxu0
    %v1237 = vadd.f32 0.0, %v1236
    %1238 = vdwg.mxu0
    %1239 = vmatpush.bf16.msra.mxu0 %v786
    %1240 = vmatpush.bf16.msra.mxu0 %v782
    %1241 = vmatpush.bf16.msra.mxu0 %v778
    %1242 = vmatpush.bf16.msra.mxu0 %v774
    %1243 = vmatpush.bf16.msra.mxu0 %v770
    %1244 = vmatpush.bf16.msra.mxu0 %v766
    %1245 = vmatpush.bf16.msra.mxu0 %v762
    %1246 = vmatpush.bf16.msra.mxu0 %v758
    %1247 = vmatmul.bf16.gmra.mxu0 %v1224
    %v1248 = vpop.f32.mrf.mxu0
    %v1249 = vadd.f32 0.0, %v1248
    %v1250 = vpop.f32.mrf.mxu0
    %v1251 = vadd.f32 0.0, %v1250
    %1252 = vdwg.mxu0
    %1253 = vmatpush.bf16.msra.mxu0 %v787
    %1254 = vmatpush.bf16.msra.mxu0 %v783
    %1255 = vmatpush.bf16.msra.mxu0 %v779
    %1256 = vmatpush.bf16.msra.mxu0 %v775
    %1257 = vmatpush.bf16.msra.mxu0 %v771
    %1258 = vmatpush.bf16.msra.mxu0 %v767
    %1259 = vmatpush.bf16.msra.mxu0 %v763
    %1260 = vmatpush.bf16.msra.mxu0 %v759
    %1261 = vmatmul.bf16.gmra.mxu0 %v1224
    %v1262 = vpop.f32.mrf.mxu0
    %v1263 = vadd.f32 0.0, %v1262
    %v1264 = vpop.f32.mrf.mxu0
    %v1265 = vadd.f32 0.0, %v1264
    %1266 = vdwg.mxu0
    %1267 = vmatpush.bf16.msra.mxu0 %v788
    %1268 = vmatpush.bf16.msra.mxu0 %v784
    %1269 = vmatpush.bf16.msra.mxu0 %v780
    %1270 = vmatpush.bf16.msra.mxu0 %v776
    %1271 = vmatpush.bf16.msra.mxu0 %v772
    %1272 = vmatpush.bf16.msra.mxu0 %v768
    %1273 = vmatpush.bf16.msra.mxu0 %v764
    %1274 = vmatpush.bf16.msra.mxu0 %v760
    %1275 = vmatmul.bf16.gmra.mxu0 %v1224
    %v1276 = vpop.f32.mrf.mxu0
    %v1277 = vadd.f32 0.0, %v1276
    %v1278 = vpop.f32.mrf.mxu0
    %v1279 = vadd.f32 0.0, %v1278
    %1280 = vdwg.mxu0
    %v1281 = vadd.f32 %v1216, %v1235
    %v1282 = vadd.f32 %v1217, %v1249
    %v1283 = vadd.f32 %v1218, %v1263
    %v1284 = vadd.f32 %v1219, %v1277
    %v1285 = vadd.f32 %v1220, %v1237
    %v1286 = vadd.f32 %v1221, %v1251
    %v1287 = vadd.f32 %v1222, %v1265
    %v1288 = vadd.f32 %v1223, %v1279
    %v1289 = vxor.u32 %v1281, 2147483648
    %v1290 = vxor.u32 %v1285, 2147483648
    %v1291 = vmul.f32 %v1289, 1.442695
    %v1292 = vpow.pop %v1291
    %v1293 = vmul.f32 %v1290, 1.442695
    %v1294 = vpow.pop %v1293
    %v1295 = vadd.f32 %v1292, 1.0
    %v1296 = vadd.f32 %v1294, 1.0
    %v1297 = vrcp.pop %v1295
    %v1298 = vmul.f32 %v1295, %v1297
    %v1299 = vsub.f32 1.0, %v1298
    %v1300 = vmul.f32 %v1297, %v1299
    %v1301 = vadd.f32 %v1297, %v1300
    %vm1302 = vweird.f32 %v1295
    %vm1303 = vweird.f32 %v1297
    %vm1304 = vmor %vm1302, %vm1303
    %v1305 = vsel %vm1304, %v1297, %v1301
    %v1306 = vand.u32 2147483647, %v1295
    %vm1307 = vcmp.eq.f32.partialorder %v1306, 8.507059e+37
    %v1308 = vand.u32 %v1295, 2147483648
    %v1309 = vor.u32 1.1754944e-38, %v1308
    %v1310 = vsel %vm1307, %v1309, %v1305
    %v1311 = vmul.f32 1.0, %v1310
    %v1312 = vrcp.pop %v1296
    %v1313 = vmul.f32 %v1296, %v1312
    %v1314 = vsub.f32 1.0, %v1313
    %v1315 = vmul.f32 %v1312, %v1314
    %v1316 = vadd.f32 %v1312, %v1315
    %vm1317 = vweird.f32 %v1296
    %vm1318 = vweird.f32 %v1312
    %vm1319 = vmor %vm1317, %vm1318
    %v1320 = vsel %vm1319, %v1312, %v1316
    %v1321 = vand.u32 2147483647, %v1296
    %vm1322 = vcmp.eq.f32.partialorder %v1321, 8.507059e+37
    %v1323 = vand.u32 %v1296, 2147483648
    %v1324 = vor.u32 1.1754944e-38, %v1323
    %v1325 = vsel %vm1322, %v1324, %v1320
    %v1326 = vmul.f32 1.0, %v1325
    %v1327 = vxor.u32 %v1282, 2147483648
    %v1328 = vxor.u32 %v1286, 2147483648
    %v1329 = vmul.f32 %v1327, 1.442695
    %v1330 = vpow.pop %v1329
    %v1331 = vmul.f32 %v1328, 1.442695
    %v1332 = vpow.pop %v1331
    %v1333 = vadd.f32 %v1330, 1.0
    %v1334 = vadd.f32 %v1332, 1.0
    %v1335 = vrcp.pop %v1333
    %v1336 = vmul.f32 %v1333, %v1335
    %v1337 = vsub.f32 1.0, %v1336
    %v1338 = vmul.f32 %v1335, %v1337
    %v1339 = vadd.f32 %v1335, %v1338
    %vm1340 = vweird.f32 %v1333
    %vm1341 = vweird.f32 %v1335
    %vm1342 = vmor %vm1340, %vm1341
    %v1343 = vsel %vm1342, %v1335, %v1339
    %v1344 = vand.u32 2147483647, %v1333
    %vm1345 = vcmp.eq.f32.partialorder %v1344, 8.507059e+37
    %v1346 = vand.u32 %v1333, 2147483648
    %v1347 = vor.u32 1.1754944e-38, %v1346
    %v1348 = vsel %vm1345, %v1347, %v1343
    %v1349 = vmul.f32 1.0, %v1348
    %v1350 = vrcp.pop %v1334
    %v1351 = vmul.f32 %v1334, %v1350
    %v1352 = vsub.f32 1.0, %v1351
    %v1353 = vmul.f32 %v1350, %v1352
    %v1354 = vadd.f32 %v1350, %v1353
    %vm1355 = vweird.f32 %v1334
    %vm1356 = vweird.f32 %v1350
    %vm1357 = vmor %vm1355, %vm1356
    %v1358 = vsel %vm1357, %v1350, %v1354
    %v1359 = vand.u32 2147483647, %v1334
    %vm1360 = vcmp.eq.f32.partialorder %v1359, 8.507059e+37
    %v1361 = vand.u32 %v1334, 2147483648
    %v1362 = vor.u32 1.1754944e-38, %v1361
    %v1363 = vsel %vm1360, %v1362, %v1358
    %v1364 = vmul.f32 1.0, %v1363
    %v1365 = vtanh.pop %v1283
    %v1366 = vtanh.pop %v1287
    %v1367 = vxor.u32 %v1284, 2147483648
    %v1368 = vxor.u32 %v1288, 2147483648
    %v1369 = vmul.f32 %v1367, 1.442695
    %v1370 = vpow.pop %v1369
    %v1371 = vmul.f32 %v1368, 1.442695
    %v1372 = vpow.pop %v1371
    %v1373 = vadd.f32 %v1370, 1.0
    %v1374 = vadd.f32 %v1372, 1.0
    %v1375 = vrcp.pop %v1373
    %v1376 = vmul.f32 %v1373, %v1375
    %v1377 = vsub.f32 1.0, %v1376
    %v1378 = vmul.f32 %v1375, %v1377
    %v1379 = vadd.f32 %v1375, %v1378
    %vm1380 = vweird.f32 %v1373
    %vm1381 = vweird.f32 %v1375
    %vm1382 = vmor %vm1380, %vm1381
    %v1383 = vsel %vm1382, %v1375, %v1379
    %v1384 = vand.u32 2147483647, %v1373
    %vm1385 = vcmp.eq.f32.partialorder %v1384, 8.507059e+37
    %v1386 = vand.u32 %v1373, 2147483648
    %v1387 = vor.u32 1.1754944e-38, %v1386
    %v1388 = vsel %vm1385, %v1387, %v1383
    %v1389 = vmul.f32 1.0, %v1388
    %v1390 = vrcp.pop %v1374
    %v1391 = vmul.f32 %v1374, %v1390
    %v1392 = vsub.f32 1.0, %v1391
    %v1393 = vmul.f32 %v1390, %v1392
    %v1394 = vadd.f32 %v1390, %v1393
    %vm1395 = vweird.f32 %v1374
    %vm1396 = vweird.f32 %v1390
    %vm1397 = vmor %vm1395, %vm1396
    %v1398 = vsel %vm1397, %v1390, %v1394
    %v1399 = vand.u32 2147483647, %v1374
    %vm1400 = vcmp.eq.f32.partialorder %v1399, 8.507059e+37
    %v1401 = vand.u32 %v1374, 2147483648
    %v1402 = vor.u32 1.1754944e-38, %v1401
    %v1403 = vsel %vm1400, %v1402, %v1398
    %v1404 = vmul.f32 1.0, %v1403
    %v1405 = vmul.f32 %v1349, %v1207
    %v1406 = vmul.f32 %v1364, %v1208
    %v1407 = vmul.f32 %v1311, %v1365
    %v1408 = vmul.f32 %v1326, %v1366
    %v1409 = vadd.f32 %v1405, %v1407
    %v1410 = vadd.f32 %v1406, %v1408
    %v1411 = vtanh.pop %v1409
    %v1412 = vtanh.pop %v1410
    %v1413 = vmul.f32 %v1389, %v1411
    %v1414 = vmul.f32 %v1404, %v1412
    %s1415 = smul.u32 6, 4
    %s1416 = smul.addr %s1415, 8
    %s1417 = scalar_lea.vmem [#allocation3], %s1416
    %v1418 = vld [vmem:[%s1417] sm:$0xff]
    %v1419 = vld [vmem:[%s1417 + $0x8] sm:$0xff]
    %v1420 = vld [vmem:[%s1417 + $0x10] sm:$0xff]
    %v1421 = vld [vmem:[%s1417 + $0x18] sm:$0xff]
    %v1422 = vld [vmem:[%s1417 + $0x20] sm:$0xff]
    %v1423 = vld [vmem:[%s1417 + $0x28] sm:$0xff]
    %v1424 = vld [vmem:[%s1417 + $0x30] sm:$0xff]
    %v1425 = vld [vmem:[%s1417 + $0x38] sm:$0xff]
    %v1426 = vpack.c.bf16 %v1414, %v1413
    %1427 = vmatpush.bf16.msra.mxu0 %v785
    %1428 = vmatpush.bf16.msra.mxu0 %v781
    %1429 = vmatpush.bf16.msra.mxu0 %v777
    %1430 = vmatpush.bf16.msra.mxu0 %v773
    %1431 = vmatpush.bf16.msra.mxu0 %v769
    %1432 = vmatpush.bf16.msra.mxu0 %v765
    %1433 = vmatpush.bf16.msra.mxu0 %v761
    %1434 = vmatpush.bf16.msra.mxu0 %v757
    %1435 = vmatmul.bf16.gmra.mxu0 %v1426
    %v1436 = vpop.f32.mrf.mxu0
    %v1437 = vadd.f32 0.0, %v1436
    %v1438 = vpop.f32.mrf.mxu0
    %v1439 = vadd.f32 0.0, %v1438
    %1440 = vdwg.mxu0
    %1441 = vmatpush.bf16.msra.mxu0 %v786
    %1442 = vmatpush.bf16.msra.mxu0 %v782
    %1443 = vmatpush.bf16.msra.mxu0 %v778
    %1444 = vmatpush.bf16.msra.mxu0 %v774
    %1445 = vmatpush.bf16.msra.mxu0 %v770
    %1446 = vmatpush.bf16.msra.mxu0 %v766
    %1447 = vmatpush.bf16.msra.mxu0 %v762
    %1448 = vmatpush.bf16.msra.mxu0 %v758
    %1449 = vmatmul.bf16.gmra.mxu0 %v1426
    %v1450 = vpop.f32.mrf.mxu0
    %v1451 = vadd.f32 0.0, %v1450
    %v1452 = vpop.f32.mrf.mxu0
    %v1453 = vadd.f32 0.0, %v1452
    %1454 = vdwg.mxu0
    %1455 = vmatpush.bf16.msra.mxu0 %v787
    %1456 = vmatpush.bf16.msra.mxu0 %v783
    %1457 = vmatpush.bf16.msra.mxu0 %v779
    %1458 = vmatpush.bf16.msra.mxu0 %v775
    %1459 = vmatpush.bf16.msra.mxu0 %v771
    %1460 = vmatpush.bf16.msra.mxu0 %v767
    %1461 = vmatpush.bf16.msra.mxu0 %v763
    %1462 = vmatpush.bf16.msra.mxu0 %v759
    %1463 = vmatmul.bf16.gmra.mxu0 %v1426
    %v1464 = vpop.f32.mrf.mxu0
    %v1465 = vadd.f32 0.0, %v1464
    %v1466 = vpop.f32.mrf.mxu0
    %v1467 = vadd.f32 0.0, %v1466
    %1468 = vdwg.mxu0
    %1469 = vmatpush.bf16.msra.mxu0 %v788
    %1470 = vmatpush.bf16.msra.mxu0 %v784
    %1471 = vmatpush.bf16.msra.mxu0 %v780
    %1472 = vmatpush.bf16.msra.mxu0 %v776
    %1473 = vmatpush.bf16.msra.mxu0 %v772
    %1474 = vmatpush.bf16.msra.mxu0 %v768
    %1475 = vmatpush.bf16.msra.mxu0 %v764
    %1476 = vmatpush.bf16.msra.mxu0 %v760
    %1477 = vmatmul.bf16.gmra.mxu0 %v1426
    %v1478 = vpop.f32.mrf.mxu0
    %v1479 = vadd.f32 0.0, %v1478
    %v1480 = vpop.f32.mrf.mxu0
    %v1481 = vadd.f32 0.0, %v1480
    %1482 = vdwg.mxu0
    %v1483 = vadd.f32 %v1418, %v1437
    %v1484 = vadd.f32 %v1419, %v1451
    %v1485 = vadd.f32 %v1420, %v1465
    %v1486 = vadd.f32 %v1421, %v1479
    %v1487 = vadd.f32 %v1422, %v1439
    %v1488 = vadd.f32 %v1423, %v1453
    %v1489 = vadd.f32 %v1424, %v1467
    %v1490 = vadd.f32 %v1425, %v1481
    %v1491 = vxor.u32 %v1483, 2147483648
    %v1492 = vxor.u32 %v1487, 2147483648
    %v1493 = vmul.f32 %v1491, 1.442695
    %v1494 = vpow.pop %v1493
    %v1495 = vmul.f32 %v1492, 1.442695
    %v1496 = vpow.pop %v1495
    %v1497 = vadd.f32 %v1494, 1.0
    %v1498 = vadd.f32 %v1496, 1.0
    %v1499 = vrcp.pop %v1497
    %v1500 = vmul.f32 %v1497, %v1499
    %v1501 = vsub.f32 1.0, %v1500
    %v1502 = vmul.f32 %v1499, %v1501
    %v1503 = vadd.f32 %v1499, %v1502
    %vm1504 = vweird.f32 %v1497
    %vm1505 = vweird.f32 %v1499
    %vm1506 = vmor %vm1504, %vm1505
    %v1507 = vsel %vm1506, %v1499, %v1503
    %v1508 = vand.u32 2147483647, %v1497
    %vm1509 = vcmp.eq.f32.partialorder %v1508, 8.507059e+37
    %v1510 = vand.u32 %v1497, 2147483648
    %v1511 = vor.u32 1.1754944e-38, %v1510
    %v1512 = vsel %vm1509, %v1511, %v1507
    %v1513 = vmul.f32 1.0, %v1512
    %v1514 = vrcp.pop %v1498
    %v1515 = vmul.f32 %v1498, %v1514
    %v1516 = vsub.f32 1.0, %v1515
    %v1517 = vmul.f32 %v1514, %v1516
    %v1518 = vadd.f32 %v1514, %v1517
    %vm1519 = vweird.f32 %v1498
    %vm1520 = vweird.f32 %v1514
    %vm1521 = vmor %vm1519, %vm1520
    %v1522 = vsel %vm1521, %v1514, %v1518
    %v1523 = vand.u32 2147483647, %v1498
    %vm1524 = vcmp.eq.f32.partialorder %v1523, 8.507059e+37
    %v1525 = vand.u32 %v1498, 2147483648
    %v1526 = vor.u32 1.1754944e-38, %v1525
    %v1527 = vsel %vm1524, %v1526, %v1522
    %v1528 = vmul.f32 1.0, %v1527
    %v1529 = vxor.u32 %v1484, 2147483648
    %v1530 = vxor.u32 %v1488, 2147483648
    %v1531 = vmul.f32 %v1529, 1.442695
    %v1532 = vpow.pop %v1531
    %v1533 = vmul.f32 %v1530, 1.442695
    %v1534 = vpow.pop %v1533
    %v1535 = vadd.f32 %v1532, 1.0
    %v1536 = vadd.f32 %v1534, 1.0
    %v1537 = vrcp.pop %v1535
    %v1538 = vmul.f32 %v1535, %v1537
    %v1539 = vsub.f32 1.0, %v1538
    %v1540 = vmul.f32 %v1537, %v1539
    %v1541 = vadd.f32 %v1537, %v1540
    %vm1542 = vweird.f32 %v1535
    %vm1543 = vweird.f32 %v1537
    %vm1544 = vmor %vm1542, %vm1543
    %v1545 = vsel %vm1544, %v1537, %v1541
    %v1546 = vand.u32 2147483647, %v1535
    %vm1547 = vcmp.eq.f32.partialorder %v1546, 8.507059e+37
    %v1548 = vand.u32 %v1535, 2147483648
    %v1549 = vor.u32 1.1754944e-38, %v1548
    %v1550 = vsel %vm1547, %v1549, %v1545
    %v1551 = vmul.f32 1.0, %v1550
    %v1552 = vrcp.pop %v1536
    %v1553 = vmul.f32 %v1536, %v1552
    %v1554 = vsub.f32 1.0, %v1553
    %v1555 = vmul.f32 %v1552, %v1554
    %v1556 = vadd.f32 %v1552, %v1555
    %vm1557 = vweird.f32 %v1536
    %vm1558 = vweird.f32 %v1552
    %vm1559 = vmor %vm1557, %vm1558
    %v1560 = vsel %vm1559, %v1552, %v1556
    %v1561 = vand.u32 2147483647, %v1536
    %vm1562 = vcmp.eq.f32.partialorder %v1561, 8.507059e+37
    %v1563 = vand.u32 %v1536, 2147483648
    %v1564 = vor.u32 1.1754944e-38, %v1563
    %v1565 = vsel %vm1562, %v1564, %v1560
    %v1566 = vmul.f32 1.0, %v1565
    %v1567 = vtanh.pop %v1485
    %v1568 = vtanh.pop %v1489
    %v1569 = vxor.u32 %v1486, 2147483648
    %v1570 = vxor.u32 %v1490, 2147483648
    %v1571 = vmul.f32 %v1569, 1.442695
    %v1572 = vpow.pop %v1571
    %v1573 = vmul.f32 %v1570, 1.442695
    %v1574 = vpow.pop %v1573
    %v1575 = vadd.f32 %v1572, 1.0
    %v1576 = vadd.f32 %v1574, 1.0
    %v1577 = vrcp.pop %v1575
    %v1578 = vmul.f32 %v1575, %v1577
    %v1579 = vsub.f32 1.0, %v1578
    %v1580 = vmul.f32 %v1577, %v1579
    %v1581 = vadd.f32 %v1577, %v1580
    %vm1582 = vweird.f32 %v1575
    %vm1583 = vweird.f32 %v1577
    %vm1584 = vmor %vm1582, %vm1583
    %v1585 = vsel %vm1584, %v1577, %v1581
    %v1586 = vand.u32 2147483647, %v1575
    %vm1587 = vcmp.eq.f32.partialorder %v1586, 8.507059e+37
    %v1588 = vand.u32 %v1575, 2147483648
    %v1589 = vor.u32 1.1754944e-38, %v1588
    %v1590 = vsel %vm1587, %v1589, %v1585
    %v1591 = vmul.f32 1.0, %v1590
    %v1592 = vrcp.pop %v1576
    %v1593 = vmul.f32 %v1576, %v1592
    %v1594 = vsub.f32 1.0, %v1593
    %v1595 = vmul.f32 %v1592, %v1594
    %v1596 = vadd.f32 %v1592, %v1595
    %vm1597 = vweird.f32 %v1576
    %vm1598 = vweird.f32 %v1592
    %vm1599 = vmor %vm1597, %vm1598
    %v1600 = vsel %vm1599, %v1592, %v1596
    %v1601 = vand.u32 2147483647, %v1576
    %vm1602 = vcmp.eq.f32.partialorder %v1601, 8.507059e+37
    %v1603 = vand.u32 %v1576, 2147483648
    %v1604 = vor.u32 1.1754944e-38, %v1603
    %v1605 = vsel %vm1602, %v1604, %v1600
    %v1606 = vmul.f32 1.0, %v1605
    %v1607 = vmul.f32 %v1551, %v1409
    %v1608 = vmul.f32 %v1566, %v1410
    %v1609 = vmul.f32 %v1513, %v1567
    %v1610 = vmul.f32 %v1528, %v1568
    %v1611 = vadd.f32 %v1607, %v1609
    %v1612 = vadd.f32 %v1608, %v1610
    %v1613 = vtanh.pop %v1611
    %v1614 = vtanh.pop %v1612
    %v1615 = vmul.f32 %v1591, %v1613
    %v1616 = vmul.f32 %v1606, %v1614
    %s1617 = smul.u32 8, 4
    %s1618 = smul.addr %s1617, 8
    %s1619 = scalar_lea.vmem [#allocation3], %s1618
    %v1620 = vld [vmem:[%s1619] sm:$0xff]
    %v1621 = vld [vmem:[%s1619 + $0x8] sm:$0xff]
    %v1622 = vld [vmem:[%s1619 + $0x10] sm:$0xff]
    %v1623 = vld [vmem:[%s1619 + $0x18] sm:$0xff]
    %v1624 = vld [vmem:[%s1619 + $0x20] sm:$0xff]
    %v1625 = vld [vmem:[%s1619 + $0x28] sm:$0xff]
    %v1626 = vld [vmem:[%s1619 + $0x30] sm:$0xff]
    %v1627 = vld [vmem:[%s1619 + $0x38] sm:$0xff]
    %v1628 = vpack.c.bf16 %v1616, %v1615
    %1629 = vmatpush.bf16.msra.mxu0 %v785
    %1630 = vmatpush.bf16.msra.mxu0 %v781
    %1631 = vmatpush.bf16.msra.mxu0 %v777
    %1632 = vmatpush.bf16.msra.mxu0 %v773
    %1633 = vmatpush.bf16.msra.mxu0 %v769
    %1634 = vmatpush.bf16.msra.mxu0 %v765
    %1635 = vmatpush.bf16.msra.mxu0 %v761
    %1636 = vmatpush.bf16.msra.mxu0 %v757
    %1637 = vmatmul.bf16.gmra.mxu0 %v1628
    %v1638 = vpop.f32.mrf.mxu0
    %v1639 = vadd.f32 0.0, %v1638
    %v1640 = vpop.f32.mrf.mxu0
    %v1641 = vadd.f32 0.0, %v1640
    %1642 = vdwg.mxu0
    %1643 = vmatpush.bf16.msra.mxu0 %v786
    %1644 = vmatpush.bf16.msra.mxu0 %v782
    %1645 = vmatpush.bf16.msra.mxu0 %v778
    %1646 = vmatpush.bf16.msra.mxu0 %v774
    %1647 = vmatpush.bf16.msra.mxu0 %v770
    %1648 = vmatpush.bf16.msra.mxu0 %v766
    %1649 = vmatpush.bf16.msra.mxu0 %v762
    %1650 = vmatpush.bf16.msra.mxu0 %v758
    %1651 = vmatmul.bf16.gmra.mxu0 %v1628
    %v1652 = vpop.f32.mrf.mxu0
    %v1653 = vadd.f32 0.0, %v1652
    %v1654 = vpop.f32.mrf.mxu0
    %v1655 = vadd.f32 0.0, %v1654
    %1656 = vdwg.mxu0
    %1657 = vmatpush.bf16.msra.mxu0 %v787
    %1658 = vmatpush.bf16.msra.mxu0 %v783
    %1659 = vmatpush.bf16.msra.mxu0 %v779
    %1660 = vmatpush.bf16.msra.mxu0 %v775
    %1661 = vmatpush.bf16.msra.mxu0 %v771
    %1662 = vmatpush.bf16.msra.mxu0 %v767
    %1663 = vmatpush.bf16.msra.mxu0 %v763
    %1664 = vmatpush.bf16.msra.mxu0 %v759
    %1665 = vmatmul.bf16.gmra.mxu0 %v1628
    %v1666 = vpop.f32.mrf.mxu0
    %v1667 = vadd.f32 0.0, %v1666
    %v1668 = vpop.f32.mrf.mxu0
    %v1669 = vadd.f32 0.0, %v1668
    %1670 = vdwg.mxu0
    %1671 = vmatpush.bf16.msra.mxu0 %v788
    %1672 = vmatpush.bf16.msra.mxu0 %v784
    %1673 = vmatpush.bf16.msra.mxu0 %v780
    %1674 = vmatpush.bf16.msra.mxu0 %v776
    %1675 = vmatpush.bf16.msra.mxu0 %v772
    %1676 = vmatpush.bf16.msra.mxu0 %v768
    %1677 = vmatpush.bf16.msra.mxu0 %v764
    %1678 = vmatpush.bf16.msra.mxu0 %v760
    %1679 = vmatmul.bf16.gmra.mxu0 %v1628
    %v1680 = vpop.f32.mrf.mxu0
    %v1681 = vadd.f32 0.0, %v1680
    %v1682 = vpop.f32.mrf.mxu0
    %v1683 = vadd.f32 0.0, %v1682
    %1684 = vdwg.mxu0
    %v1685 = vadd.f32 %v1620, %v1639
    %v1686 = vadd.f32 %v1621, %v1653
    %v1687 = vadd.f32 %v1622, %v1667
    %v1688 = vadd.f32 %v1623, %v1681
    %v1689 = vadd.f32 %v1624, %v1641
    %v1690 = vadd.f32 %v1625, %v1655
    %v1691 = vadd.f32 %v1626, %v1669
    %v1692 = vadd.f32 %v1627, %v1683
    %v1693 = vxor.u32 %v1685, 2147483648
    %v1694 = vxor.u32 %v1689, 2147483648
    %v1695 = vmul.f32 %v1693, 1.442695
    %v1696 = vpow.pop %v1695
    %v1697 = vmul.f32 %v1694, 1.442695
    %v1698 = vpow.pop %v1697
    %v1699 = vadd.f32 %v1696, 1.0
    %v1700 = vadd.f32 %v1698, 1.0
    %v1701 = vrcp.pop %v1699
    %v1702 = vmul.f32 %v1699, %v1701
    %v1703 = vsub.f32 1.0, %v1702
    %v1704 = vmul.f32 %v1701, %v1703
    %v1705 = vadd.f32 %v1701, %v1704
    %vm1706 = vweird.f32 %v1699
    %vm1707 = vweird.f32 %v1701
    %vm1708 = vmor %vm1706, %vm1707
    %v1709 = vsel %vm1708, %v1701, %v1705
    %v1710 = vand.u32 2147483647, %v1699
    %vm1711 = vcmp.eq.f32.partialorder %v1710, 8.507059e+37
    %v1712 = vand.u32 %v1699, 2147483648
    %v1713 = vor.u32 1.1754944e-38, %v1712
    %v1714 = vsel %vm1711, %v1713, %v1709
    %v1715 = vmul.f32 1.0, %v1714
    %v1716 = vrcp.pop %v1700
    %v1717 = vmul.f32 %v1700, %v1716
    %v1718 = vsub.f32 1.0, %v1717
    %v1719 = vmul.f32 %v1716, %v1718
    %v1720 = vadd.f32 %v1716, %v1719
    %vm1721 = vweird.f32 %v1700
    %vm1722 = vweird.f32 %v1716
    %vm1723 = vmor %vm1721, %vm1722
    %v1724 = vsel %vm1723, %v1716, %v1720
    %v1725 = vand.u32 2147483647, %v1700
    %vm1726 = vcmp.eq.f32.partialorder %v1725, 8.507059e+37
    %v1727 = vand.u32 %v1700, 2147483648
    %v1728 = vor.u32 1.1754944e-38, %v1727
    %v1729 = vsel %vm1726, %v1728, %v1724
    %v1730 = vmul.f32 1.0, %v1729
    %v1731 = vxor.u32 %v1686, 2147483648
    %v1732 = vxor.u32 %v1690, 2147483648
    %v1733 = vmul.f32 %v1731, 1.442695
    %v1734 = vpow.pop %v1733
    %v1735 = vmul.f32 %v1732, 1.442695
    %v1736 = vpow.pop %v1735
    %v1737 = vadd.f32 %v1734, 1.0
    %v1738 = vadd.f32 %v1736, 1.0
    %v1739 = vrcp.pop %v1737
    %v1740 = vmul.f32 %v1737, %v1739
    %v1741 = vsub.f32 1.0, %v1740
    %v1742 = vmul.f32 %v1739, %v1741
    %v1743 = vadd.f32 %v1739, %v1742
    %vm1744 = vweird.f32 %v1737
    %vm1745 = vweird.f32 %v1739
    %vm1746 = vmor %vm1744, %vm1745
    %v1747 = vsel %vm1746, %v1739, %v1743
    %v1748 = vand.u32 2147483647, %v1737
    %vm1749 = vcmp.eq.f32.partialorder %v1748, 8.507059e+37
    %v1750 = vand.u32 %v1737, 2147483648
    %v1751 = vor.u32 1.1754944e-38, %v1750
    %v1752 = vsel %vm1749, %v1751, %v1747
    %v1753 = vmul.f32 1.0, %v1752
    %v1754 = vrcp.pop %v1738
    %v1755 = vmul.f32 %v1738, %v1754
    %v1756 = vsub.f32 1.0, %v1755
    %v1757 = vmul.f32 %v1754, %v1756
    %v1758 = vadd.f32 %v1754, %v1757
    %vm1759 = vweird.f32 %v1738
    %vm1760 = vweird.f32 %v1754
    %vm1761 = vmor %vm1759, %vm1760
    %v1762 = vsel %vm1761, %v1754, %v1758
    %v1763 = vand.u32 2147483647, %v1738
    %vm1764 = vcmp.eq.f32.partialorder %v1763, 8.507059e+37
    %v1765 = vand.u32 %v1738, 2147483648
    %v1766 = vor.u32 1.1754944e-38, %v1765
    %v1767 = vsel %vm1764, %v1766, %v1762
    %v1768 = vmul.f32 1.0, %v1767
    %v1769 = vtanh.pop %v1687
    %v1770 = vtanh.pop %v1691
    %v1771 = vxor.u32 %v1688, 2147483648
    %v1772 = vxor.u32 %v1692, 2147483648
    %v1773 = vmul.f32 %v1771, 1.442695
    %v1774 = vpow.pop %v1773
    %v1775 = vmul.f32 %v1772, 1.442695
    %v1776 = vpow.pop %v1775
    %v1777 = vadd.f32 %v1774, 1.0
    %v1778 = vadd.f32 %v1776, 1.0
    %v1779 = vrcp.pop %v1777
    %v1780 = vmul.f32 %v1777, %v1779
    %v1781 = vsub.f32 1.0, %v1780
    %v1782 = vmul.f32 %v1779, %v1781
    %v1783 = vadd.f32 %v1779, %v1782
    %vm1784 = vweird.f32 %v1777
    %vm1785 = vweird.f32 %v1779
    %vm1786 = vmor %vm1784, %vm1785
    %v1787 = vsel %vm1786, %v1779, %v1783
    %v1788 = vand.u32 2147483647, %v1777
    %vm1789 = vcmp.eq.f32.partialorder %v1788, 8.507059e+37
    %v1790 = vand.u32 %v1777, 2147483648
    %v1791 = vor.u32 1.1754944e-38, %v1790
    %v1792 = vsel %vm1789, %v1791, %v1787
    %v1793 = vmul.f32 1.0, %v1792
    %v1794 = vrcp.pop %v1778
    %v1795 = vmul.f32 %v1778, %v1794
    %v1796 = vsub.f32 1.0, %v1795
    %v1797 = vmul.f32 %v1794, %v1796
    %v1798 = vadd.f32 %v1794, %v1797
    %vm1799 = vweird.f32 %v1778
    %vm1800 = vweird.f32 %v1794
    %vm1801 = vmor %vm1799, %vm1800
    %v1802 = vsel %vm1801, %v1794, %v1798
    %v1803 = vand.u32 2147483647, %v1778
    %vm1804 = vcmp.eq.f32.partialorder %v1803, 8.507059e+37
    %v1805 = vand.u32 %v1778, 2147483648
    %v1806 = vor.u32 1.1754944e-38, %v1805
    %v1807 = vsel %vm1804, %v1806, %v1802
    %v1808 = vmul.f32 1.0, %v1807
    %v1809 = vmul.f32 %v1753, %v1611
    %v1810 = vmul.f32 %v1768, %v1612
    %v1811 = vmul.f32 %v1715, %v1769
    %v1812 = vmul.f32 %v1730, %v1770
    %v1813 = vadd.f32 %v1809, %v1811
    %v1814 = vadd.f32 %v1810, %v1812
    %v1815 = vtanh.pop %v1813
    %v1816 = vtanh.pop %v1814
    %v1817 = vmul.f32 %v1793, %v1815
    %v1818 = vmul.f32 %v1808, %v1816
    %s1819 = smul.u32 10, 4
    %s1820 = smul.addr %s1819, 8
    %s1821 = scalar_lea.vmem [#allocation3], %s1820
    %v1822 = vld [vmem:[%s1821] sm:$0xff]
    %v1823 = vld [vmem:[%s1821 + $0x8] sm:$0xff]
    %v1824 = vld [vmem:[%s1821 + $0x10] sm:$0xff]
    %v1825 = vld [vmem:[%s1821 + $0x18] sm:$0xff]
    %v1826 = vld [vmem:[%s1821 + $0x20] sm:$0xff]
    %v1827 = vld [vmem:[%s1821 + $0x28] sm:$0xff]
    %v1828 = vld [vmem:[%s1821 + $0x30] sm:$0xff]
    %v1829 = vld [vmem:[%s1821 + $0x38] sm:$0xff]
    %v1830 = vpack.c.bf16 %v1818, %v1817
    %1831 = vmatpush.bf16.msra.mxu0 %v785
    %1832 = vmatpush.bf16.msra.mxu0 %v781
    %1833 = vmatpush.bf16.msra.mxu0 %v777
    %1834 = vmatpush.bf16.msra.mxu0 %v773
    %1835 = vmatpush.bf16.msra.mxu0 %v769
    %1836 = vmatpush.bf16.msra.mxu0 %v765
    %1837 = vmatpush.bf16.msra.mxu0 %v761
    %1838 = vmatpush.bf16.msra.mxu0 %v757
    %1839 = vmatmul.bf16.gmra.mxu0 %v1830
    %v1840 = vpop.f32.mrf.mxu0
    %v1841 = vadd.f32 0.0, %v1840
    %v1842 = vpop.f32.mrf.mxu0
    %v1843 = vadd.f32 0.0, %v1842
    %1844 = vdwg.mxu0
    %1845 = vmatpush.bf16.msra.mxu0 %v786
    %1846 = vmatpush.bf16.msra.mxu0 %v782
    %1847 = vmatpush.bf16.msra.mxu0 %v778
    %1848 = vmatpush.bf16.msra.mxu0 %v774
    %1849 = vmatpush.bf16.msra.mxu0 %v770
    %1850 = vmatpush.bf16.msra.mxu0 %v766
    %1851 = vmatpush.bf16.msra.mxu0 %v762
    %1852 = vmatpush.bf16.msra.mxu0 %v758
    %1853 = vmatmul.bf16.gmra.mxu0 %v1830
    %v1854 = vpop.f32.mrf.mxu0
    %v1855 = vadd.f32 0.0, %v1854
    %v1856 = vpop.f32.mrf.mxu0
    %v1857 = vadd.f32 0.0, %v1856
    %1858 = vdwg.mxu0
    %1859 = vmatpush.bf16.msra.mxu0 %v787
    %1860 = vmatpush.bf16.msra.mxu0 %v783
    %1861 = vmatpush.bf16.msra.mxu0 %v779
    %1862 = vmatpush.bf16.msra.mxu0 %v775
    %1863 = vmatpush.bf16.msra.mxu0 %v771
    %1864 = vmatpush.bf16.msra.mxu0 %v767
    %1865 = vmatpush.bf16.msra.mxu0 %v763
    %1866 = vmatpush.bf16.msra.mxu0 %v759
    %1867 = vmatmul.bf16.gmra.mxu0 %v1830
    %v1868 = vpop.f32.mrf.mxu0
    %v1869 = vadd.f32 0.0, %v1868
    %v1870 = vpop.f32.mrf.mxu0
    %v1871 = vadd.f32 0.0, %v1870
    %1872 = vdwg.mxu0
    %1873 = vmatpush.bf16.msra.mxu0 %v788
    %1874 = vmatpush.bf16.msra.mxu0 %v784
    %1875 = vmatpush.bf16.msra.mxu0 %v780
    %1876 = vmatpush.bf16.msra.mxu0 %v776
    %1877 = vmatpush.bf16.msra.mxu0 %v772
    %1878 = vmatpush.bf16.msra.mxu0 %v768
    %1879 = vmatpush.bf16.msra.mxu0 %v764
    %1880 = vmatpush.bf16.msra.mxu0 %v760
    %1881 = vmatmul.bf16.gmra.mxu0 %v1830
    %v1882 = vpop.f32.mrf.mxu0
    %v1883 = vadd.f32 0.0, %v1882
    %v1884 = vpop.f32.mrf.mxu0
    %v1885 = vadd.f32 0.0, %v1884
    %1886 = vdwg.mxu0
    %v1887 = vadd.f32 %v1822, %v1841
    %v1888 = vadd.f32 %v1823, %v1855
    %v1889 = vadd.f32 %v1824, %v1869
    %v1890 = vadd.f32 %v1825, %v1883
    %v1891 = vadd.f32 %v1826, %v1843
    %v1892 = vadd.f32 %v1827, %v1857
    %v1893 = vadd.f32 %v1828, %v1871
    %v1894 = vadd.f32 %v1829, %v1885
    %v1895 = vxor.u32 %v1887, 2147483648
    %v1896 = vxor.u32 %v1891, 2147483648
    %v1897 = vmul.f32 %v1895, 1.442695
    %v1898 = vpow.pop %v1897
    %v1899 = vmul.f32 %v1896, 1.442695
    %v1900 = vpow.pop %v1899
    %v1901 = vadd.f32 %v1898, 1.0
    %v1902 = vadd.f32 %v1900, 1.0
    %v1903 = vrcp.pop %v1901
    %v1904 = vmul.f32 %v1901, %v1903
    %v1905 = vsub.f32 1.0, %v1904
    %v1906 = vmul.f32 %v1903, %v1905
    %v1907 = vadd.f32 %v1903, %v1906
    %vm1908 = vweird.f32 %v1901
    %vm1909 = vweird.f32 %v1903
    %vm1910 = vmor %vm1908, %vm1909
    %v1911 = vsel %vm1910, %v1903, %v1907
    %v1912 = vand.u32 2147483647, %v1901
    %vm1913 = vcmp.eq.f32.partialorder %v1912, 8.507059e+37
    %v1914 = vand.u32 %v1901, 2147483648
    %v1915 = vor.u32 1.1754944e-38, %v1914
    %v1916 = vsel %vm1913, %v1915, %v1911
    %v1917 = vmul.f32 1.0, %v1916
    %v1918 = vrcp.pop %v1902
    %v1919 = vmul.f32 %v1902, %v1918
    %v1920 = vsub.f32 1.0, %v1919
    %v1921 = vmul.f32 %v1918, %v1920
    %v1922 = vadd.f32 %v1918, %v1921
    %vm1923 = vweird.f32 %v1902
    %vm1924 = vweird.f32 %v1918
    %vm1925 = vmor %vm1923, %vm1924
    %v1926 = vsel %vm1925, %v1918, %v1922
    %v1927 = vand.u32 2147483647, %v1902
    %vm1928 = vcmp.eq.f32.partialorder %v1927, 8.507059e+37
    %v1929 = vand.u32 %v1902, 2147483648
    %v1930 = vor.u32 1.1754944e-38, %v1929
    %v1931 = vsel %vm1928, %v1930, %v1926
    %v1932 = vmul.f32 1.0, %v1931
    %v1933 = vxor.u32 %v1888, 2147483648
    %v1934 = vxor.u32 %v1892, 2147483648
    %v1935 = vmul.f32 %v1933, 1.442695
    %v1936 = vpow.pop %v1935
    %v1937 = vmul.f32 %v1934, 1.442695
    %v1938 = vpow.pop %v1937
    %v1939 = vadd.f32 %v1936, 1.0
    %v1940 = vadd.f32 %v1938, 1.0
    %v1941 = vrcp.pop %v1939
    %v1942 = vmul.f32 %v1939, %v1941
    %v1943 = vsub.f32 1.0, %v1942
    %v1944 = vmul.f32 %v1941, %v1943
    %v1945 = vadd.f32 %v1941, %v1944
    %vm1946 = vweird.f32 %v1939
    %vm1947 = vweird.f32 %v1941
    %vm1948 = vmor %vm1946, %vm1947
    %v1949 = vsel %vm1948, %v1941, %v1945
    %v1950 = vand.u32 2147483647, %v1939
    %vm1951 = vcmp.eq.f32.partialorder %v1950, 8.507059e+37
    %v1952 = vand.u32 %v1939, 2147483648
    %v1953 = vor.u32 1.1754944e-38, %v1952
    %v1954 = vsel %vm1951, %v1953, %v1949
    %v1955 = vmul.f32 1.0, %v1954
    %v1956 = vrcp.pop %v1940
    %v1957 = vmul.f32 %v1940, %v1956
    %v1958 = vsub.f32 1.0, %v1957
    %v1959 = vmul.f32 %v1956, %v1958
    %v1960 = vadd.f32 %v1956, %v1959
    %vm1961 = vweird.f32 %v1940
    %vm1962 = vweird.f32 %v1956
    %vm1963 = vmor %vm1961, %vm1962
    %v1964 = vsel %vm1963, %v1956, %v1960
    %v1965 = vand.u32 2147483647, %v1940
    %vm1966 = vcmp.eq.f32.partialorder %v1965, 8.507059e+37
    %v1967 = vand.u32 %v1940, 2147483648
    %v1968 = vor.u32 1.1754944e-38, %v1967
    %v1969 = vsel %vm1966, %v1968, %v1964
    %v1970 = vmul.f32 1.0, %v1969
    %v1971 = vtanh.pop %v1889
    %v1972 = vtanh.pop %v1893
    %v1973 = vxor.u32 %v1890, 2147483648
    %v1974 = vxor.u32 %v1894, 2147483648
    %v1975 = vmul.f32 %v1973, 1.442695
    %v1976 = vpow.pop %v1975
    %v1977 = vmul.f32 %v1974, 1.442695
    %v1978 = vpow.pop %v1977
    %v1979 = vadd.f32 %v1976, 1.0
    %v1980 = vadd.f32 %v1978, 1.0
    %v1981 = vrcp.pop %v1979
    %v1982 = vmul.f32 %v1979, %v1981
    %v1983 = vsub.f32 1.0, %v1982
    %v1984 = vmul.f32 %v1981, %v1983
    %v1985 = vadd.f32 %v1981, %v1984
    %vm1986 = vweird.f32 %v1979
    %vm1987 = vweird.f32 %v1981
    %vm1988 = vmor %vm1986, %vm1987
    %v1989 = vsel %vm1988, %v1981, %v1985
    %v1990 = vand.u32 2147483647, %v1979
    %vm1991 = vcmp.eq.f32.partialorder %v1990, 8.507059e+37
    %v1992 = vand.u32 %v1979, 2147483648
    %v1993 = vor.u32 1.1754944e-38, %v1992
    %v1994 = vsel %vm1991, %v1993, %v1989
    %v1995 = vmul.f32 1.0, %v1994
    %v1996 = vrcp.pop %v1980
    %v1997 = vmul.f32 %v1980, %v1996
    %v1998 = vsub.f32 1.0, %v1997
    %v1999 = vmul.f32 %v1996, %v1998
    %v2000 = vadd.f32 %v1996, %v1999
    %vm2001 = vweird.f32 %v1980
    %vm2002 = vweird.f32 %v1996
    %vm2003 = vmor %vm2001, %vm2002
    %v2004 = vsel %vm2003, %v1996, %v2000
    %v2005 = vand.u32 2147483647, %v1980
    %vm2006 = vcmp.eq.f32.partialorder %v2005, 8.507059e+37
    %v2007 = vand.u32 %v1980, 2147483648
    %v2008 = vor.u32 1.1754944e-38, %v2007
    %v2009 = vsel %vm2006, %v2008, %v2004
    %v2010 = vmul.f32 1.0, %v2009
    %v2011 = vmul.f32 %v1955, %v1813
    %v2012 = vmul.f32 %v1970, %v1814
    %v2013 = vmul.f32 %v1917, %v1971
    %v2014 = vmul.f32 %v1932, %v1972
    %v2015 = vadd.f32 %v2011, %v2013
    %v2016 = vadd.f32 %v2012, %v2014
    %v2017 = vtanh.pop %v2015
    %v2018 = vtanh.pop %v2016
    %v2019 = vmul.f32 %v1995, %v2017
    %v2020 = vmul.f32 %v2010, %v2018
    %s2021 = smul.u32 12, 4
    %s2022 = smul.addr %s2021, 8
    %s2023 = scalar_lea.vmem [#allocation3], %s2022
    %v2024 = vld [vmem:[%s2023] sm:$0xff]
    %v2025 = vld [vmem:[%s2023 + $0x8] sm:$0xff]
    %v2026 = vld [vmem:[%s2023 + $0x10] sm:$0xff]
    %v2027 = vld [vmem:[%s2023 + $0x18] sm:$0xff]
    %v2028 = vld [vmem:[%s2023 + $0x20] sm:$0xff]
    %v2029 = vld [vmem:[%s2023 + $0x28] sm:$0xff]
    %v2030 = vld [vmem:[%s2023 + $0x30] sm:$0xff]
    %v2031 = vld [vmem:[%s2023 + $0x38] sm:$0xff]
    %v2032 = vpack.c.bf16 %v2020, %v2019
    %2033 = vmatpush.bf16.msra.mxu0 %v785
    %2034 = vmatpush.bf16.msra.mxu0 %v781
    %2035 = vmatpush.bf16.msra.mxu0 %v777
    %2036 = vmatpush.bf16.msra.mxu0 %v773
    %2037 = vmatpush.bf16.msra.mxu0 %v769
    %2038 = vmatpush.bf16.msra.mxu0 %v765
    %2039 = vmatpush.bf16.msra.mxu0 %v761
    %2040 = vmatpush.bf16.msra.mxu0 %v757
    %2041 = vmatmul.bf16.gmra.mxu0 %v2032
    %v2042 = vpop.f32.mrf.mxu0
    %v2043 = vadd.f32 0.0, %v2042
    %v2044 = vpop.f32.mrf.mxu0
    %v2045 = vadd.f32 0.0, %v2044
    %2046 = vdwg.mxu0
    %2047 = vmatpush.bf16.msra.mxu0 %v786
    %2048 = vmatpush.bf16.msra.mxu0 %v782
    %2049 = vmatpush.bf16.msra.mxu0 %v778
    %2050 = vmatpush.bf16.msra.mxu0 %v774
    %2051 = vmatpush.bf16.msra.mxu0 %v770
    %2052 = vmatpush.bf16.msra.mxu0 %v766
    %2053 = vmatpush.bf16.msra.mxu0 %v762
    %2054 = vmatpush.bf16.msra.mxu0 %v758
    %2055 = vmatmul.bf16.gmra.mxu0 %v2032
    %v2056 = vpop.f32.mrf.mxu0
    %v2057 = vadd.f32 0.0, %v2056
    %v2058 = vpop.f32.mrf.mxu0
    %v2059 = vadd.f32 0.0, %v2058
    %2060 = vdwg.mxu0
    %2061 = vmatpush.bf16.msra.mxu0 %v787
    %2062 = vmatpush.bf16.msra.mxu0 %v783
    %2063 = vmatpush.bf16.msra.mxu0 %v779
    %2064 = vmatpush.bf16.msra.mxu0 %v775
    %2065 = vmatpush.bf16.msra.mxu0 %v771
    %2066 = vmatpush.bf16.msra.mxu0 %v767
    %2067 = vmatpush.bf16.msra.mxu0 %v763
    %2068 = vmatpush.bf16.msra.mxu0 %v759
    %2069 = vmatmul.bf16.gmra.mxu0 %v2032
    %v2070 = vpop.f32.mrf.mxu0
    %v2071 = vadd.f32 0.0, %v2070
    %v2072 = vpop.f32.mrf.mxu0
    %v2073 = vadd.f32 0.0, %v2072
    %2074 = vdwg.mxu0
    %2075 = vmatpush.bf16.msra.mxu0 %v788
    %2076 = vmatpush.bf16.msra.mxu0 %v784
    %2077 = vmatpush.bf16.msra.mxu0 %v780
    %2078 = vmatpush.bf16.msra.mxu0 %v776
    %2079 = vmatpush.bf16.msra.mxu0 %v772
    %2080 = vmatpush.bf16.msra.mxu0 %v768
    %2081 = vmatpush.bf16.msra.mxu0 %v764
    %2082 = vmatpush.bf16.msra.mxu0 %v760
    %2083 = vmatmul.bf16.gmra.mxu0 %v2032
    %v2084 = vpop.f32.mrf.mxu0
    %v2085 = vadd.f32 0.0, %v2084
    %v2086 = vpop.f32.mrf.mxu0
    %v2087 = vadd.f32 0.0, %v2086
    %2088 = vdwg.mxu0
    %v2089 = vadd.f32 %v2024, %v2043
    %v2090 = vadd.f32 %v2025, %v2057
    %v2091 = vadd.f32 %v2026, %v2071
    %v2092 = vadd.f32 %v2027, %v2085
    %v2093 = vadd.f32 %v2028, %v2045
    %v2094 = vadd.f32 %v2029, %v2059
    %v2095 = vadd.f32 %v2030, %v2073
    %v2096 = vadd.f32 %v2031, %v2087
    %v2097 = vxor.u32 %v2089, 2147483648
    %v2098 = vxor.u32 %v2093, 2147483648
    %v2099 = vmul.f32 %v2097, 1.442695
    %v2100 = vpow.pop %v2099
    %v2101 = vmul.f32 %v2098, 1.442695
    %v2102 = vpow.pop %v2101
    %v2103 = vadd.f32 %v2100, 1.0
    %v2104 = vadd.f32 %v2102, 1.0
    %v2105 = vrcp.pop %v2103
    %v2106 = vmul.f32 %v2103, %v2105
    %v2107 = vsub.f32 1.0, %v2106
    %v2108 = vmul.f32 %v2105, %v2107
    %v2109 = vadd.f32 %v2105, %v2108
    %vm2110 = vweird.f32 %v2103
    %vm2111 = vweird.f32 %v2105
    %vm2112 = vmor %vm2110, %vm2111
    %v2113 = vsel %vm2112, %v2105, %v2109
    %v2114 = vand.u32 2147483647, %v2103
    %vm2115 = vcmp.eq.f32.partialorder %v2114, 8.507059e+37
    %v2116 = vand.u32 %v2103, 2147483648
    %v2117 = vor.u32 1.1754944e-38, %v2116
    %v2118 = vsel %vm2115, %v2117, %v2113
    %v2119 = vmul.f32 1.0, %v2118
    %v2120 = vrcp.pop %v2104
    %v2121 = vmul.f32 %v2104, %v2120
    %v2122 = vsub.f32 1.0, %v2121
    %v2123 = vmul.f32 %v2120, %v2122
    %v2124 = vadd.f32 %v2120, %v2123
    %vm2125 = vweird.f32 %v2104
    %vm2126 = vweird.f32 %v2120
    %vm2127 = vmor %vm2125, %vm2126
    %v2128 = vsel %vm2127, %v2120, %v2124
    %v2129 = vand.u32 2147483647, %v2104
    %vm2130 = vcmp.eq.f32.partialorder %v2129, 8.507059e+37
    %v2131 = vand.u32 %v2104, 2147483648
    %v2132 = vor.u32 1.1754944e-38, %v2131
    %v2133 = vsel %vm2130, %v2132, %v2128
    %v2134 = vmul.f32 1.0, %v2133
    %v2135 = vxor.u32 %v2090, 2147483648
    %v2136 = vxor.u32 %v2094, 2147483648
    %v2137 = vmul.f32 %v2135, 1.442695
    %v2138 = vpow.pop %v2137
    %v2139 = vmul.f32 %v2136, 1.442695
    %v2140 = vpow.pop %v2139
    %v2141 = vadd.f32 %v2138, 1.0
    %v2142 = vadd.f32 %v2140, 1.0
    %v2143 = vrcp.pop %v2141
    %v2144 = vmul.f32 %v2141, %v2143
    %v2145 = vsub.f32 1.0, %v2144
    %v2146 = vmul.f32 %v2143, %v2145
    %v2147 = vadd.f32 %v2143, %v2146
    %vm2148 = vweird.f32 %v2141
    %vm2149 = vweird.f32 %v2143
    %vm2150 = vmor %vm2148, %vm2149
    %v2151 = vsel %vm2150, %v2143, %v2147
    %v2152 = vand.u32 2147483647, %v2141
    %vm2153 = vcmp.eq.f32.partialorder %v2152, 8.507059e+37
    %v2154 = vand.u32 %v2141, 2147483648
    %v2155 = vor.u32 1.1754944e-38, %v2154
    %v2156 = vsel %vm2153, %v2155, %v2151
    %v2157 = vmul.f32 1.0, %v2156
    %v2158 = vrcp.pop %v2142
    %v2159 = vmul.f32 %v2142, %v2158
    %v2160 = vsub.f32 1.0, %v2159
    %v2161 = vmul.f32 %v2158, %v2160
    %v2162 = vadd.f32 %v2158, %v2161
    %vm2163 = vweird.f32 %v2142
    %vm2164 = vweird.f32 %v2158
    %vm2165 = vmor %vm2163, %vm2164
    %v2166 = vsel %vm2165, %v2158, %v2162
    %v2167 = vand.u32 2147483647, %v2142
    %vm2168 = vcmp.eq.f32.partialorder %v2167, 8.507059e+37
    %v2169 = vand.u32 %v2142, 2147483648
    %v2170 = vor.u32 1.1754944e-38, %v2169
    %v2171 = vsel %vm2168, %v2170, %v2166
    %v2172 = vmul.f32 1.0, %v2171
    %v2173 = vtanh.pop %v2091
    %v2174 = vtanh.pop %v2095
    %v2175 = vxor.u32 %v2092, 2147483648
    %v2176 = vxor.u32 %v2096, 2147483648
    %v2177 = vmul.f32 %v2175, 1.442695
    %v2178 = vpow.pop %v2177
    %v2179 = vmul.f32 %v2176, 1.442695
    %v2180 = vpow.pop %v2179
    %v2181 = vadd.f32 %v2178, 1.0
    %v2182 = vadd.f32 %v2180, 1.0
    %v2183 = vrcp.pop %v2181
    %v2184 = vmul.f32 %v2181, %v2183
    %v2185 = vsub.f32 1.0, %v2184
    %v2186 = vmul.f32 %v2183, %v2185
    %v2187 = vadd.f32 %v2183, %v2186
    %vm2188 = vweird.f32 %v2181
    %vm2189 = vweird.f32 %v2183
    %vm2190 = vmor %vm2188, %vm2189
    %v2191 = vsel %vm2190, %v2183, %v2187
    %v2192 = vand.u32 2147483647, %v2181
    %vm2193 = vcmp.eq.f32.partialorder %v2192, 8.507059e+37
    %v2194 = vand.u32 %v2181, 2147483648
    %v2195 = vor.u32 1.1754944e-38, %v2194
    %v2196 = vsel %vm2193, %v2195, %v2191
    %v2197 = vmul.f32 1.0, %v2196
    %v2198 = vrcp.pop %v2182
    %v2199 = vmul.f32 %v2182, %v2198
    %v2200 = vsub.f32 1.0, %v2199
    %v2201 = vmul.f32 %v2198, %v2200
    %v2202 = vadd.f32 %v2198, %v2201
    %vm2203 = vweird.f32 %v2182
    %vm2204 = vweird.f32 %v2198
    %vm2205 = vmor %vm2203, %vm2204
    %v2206 = vsel %vm2205, %v2198, %v2202
    %v2207 = vand.u32 2147483647, %v2182
    %vm2208 = vcmp.eq.f32.partialorder %v2207, 8.507059e+37
    %v2209 = vand.u32 %v2182, 2147483648
    %v2210 = vor.u32 1.1754944e-38, %v2209
    %v2211 = vsel %vm2208, %v2210, %v2206
    %v2212 = vmul.f32 1.0, %v2211
    %v2213 = vmul.f32 %v2157, %v2015
    %v2214 = vmul.f32 %v2172, %v2016
    %v2215 = vmul.f32 %v2119, %v2173
    %v2216 = vmul.f32 %v2134, %v2174
    %v2217 = vadd.f32 %v2213, %v2215
    %v2218 = vadd.f32 %v2214, %v2216
    %v2219 = vtanh.pop %v2217
    %v2220 = vtanh.pop %v2218
    %v2221 = vmul.f32 %v2197, %v2219
    %v2222 = vmul.f32 %v2212, %v2220
    %s2223 = smul.u32 14, 4
    %s2224 = smul.addr %s2223, 8
    %s2225 = scalar_lea.vmem [#allocation3], %s2224
    %v2226 = vld [vmem:[%s2225] sm:$0xff]
    %v2227 = vld [vmem:[%s2225 + $0x8] sm:$0xff]
    %v2228 = vld [vmem:[%s2225 + $0x10] sm:$0xff]
    %v2229 = vld [vmem:[%s2225 + $0x18] sm:$0xff]
    %v2230 = vld [vmem:[%s2225 + $0x20] sm:$0xff]
    %v2231 = vld [vmem:[%s2225 + $0x28] sm:$0xff]
    %v2232 = vld [vmem:[%s2225 + $0x30] sm:$0xff]
    %v2233 = vld [vmem:[%s2225 + $0x38] sm:$0xff]
    %v2234 = vpack.c.bf16 %v2222, %v2221
    %2235 = vmatpush.bf16.msra.mxu0 %v785
    %2236 = vmatpush.bf16.msra.mxu0 %v781
    %2237 = vmatpush.bf16.msra.mxu0 %v777
    %2238 = vmatpush.bf16.msra.mxu0 %v773
    %2239 = vmatpush.bf16.msra.mxu0 %v769
    %2240 = vmatpush.bf16.msra.mxu0 %v765
    %2241 = vmatpush.bf16.msra.mxu0 %v761
    %2242 = vmatpush.bf16.msra.mxu0 %v757
    %2243 = vmatmul.bf16.gmra.mxu0 %v2234
    %v2244 = vpop.f32.mrf.mxu0
    %v2245 = vadd.f32 0.0, %v2244
    %v2246 = vpop.f32.mrf.mxu0
    %v2247 = vadd.f32 0.0, %v2246
    %2248 = vdwg.mxu0
    %2249 = vmatpush.bf16.msra.mxu0 %v786
    %2250 = vmatpush.bf16.msra.mxu0 %v782
    %2251 = vmatpush.bf16.msra.mxu0 %v778
    %2252 = vmatpush.bf16.msra.mxu0 %v774
    %2253 = vmatpush.bf16.msra.mxu0 %v770
    %2254 = vmatpush.bf16.msra.mxu0 %v766
    %2255 = vmatpush.bf16.msra.mxu0 %v762
    %2256 = vmatpush.bf16.msra.mxu0 %v758
    %2257 = vmatmul.bf16.gmra.mxu0 %v2234
    %v2258 = vpop.f32.mrf.mxu0
    %v2259 = vadd.f32 0.0, %v2258
    %v2260 = vpop.f32.mrf.mxu0
    %v2261 = vadd.f32 0.0, %v2260
    %2262 = vdwg.mxu0
    %2263 = vmatpush.bf16.msra.mxu0 %v787
    %2264 = vmatpush.bf16.msra.mxu0 %v783
    %2265 = vmatpush.bf16.msra.mxu0 %v779
    %2266 = vmatpush.bf16.msra.mxu0 %v775
    %2267 = vmatpush.bf16.msra.mxu0 %v771
    %2268 = vmatpush.bf16.msra.mxu0 %v767
    %2269 = vmatpush.bf16.msra.mxu0 %v763
    %2270 = vmatpush.bf16.msra.mxu0 %v759
    %2271 = vmatmul.bf16.gmra.mxu0 %v2234
    %v2272 = vpop.f32.mrf.mxu0
    %v2273 = vadd.f32 0.0, %v2272
    %v2274 = vpop.f32.mrf.mxu0
    %v2275 = vadd.f32 0.0, %v2274
    %2276 = vdwg.mxu0
    %2277 = vmatpush.bf16.msra.mxu0 %v788
    %2278 = vmatpush.bf16.msra.mxu0 %v784
    %2279 = vmatpush.bf16.msra.mxu0 %v780
    %2280 = vmatpush.bf16.msra.mxu0 %v776
    %2281 = vmatpush.bf16.msra.mxu0 %v772
    %2282 = vmatpush.bf16.msra.mxu0 %v768
    %2283 = vmatpush.bf16.msra.mxu0 %v764
    %2284 = vmatpush.bf16.msra.mxu0 %v760
    %2285 = vmatmul.bf16.gmra.mxu0 %v2234
    %v2286 = vpop.f32.mrf.mxu0
    %v2287 = vadd.f32 0.0, %v2286
    %v2288 = vpop.f32.mrf.mxu0
    %v2289 = vadd.f32 0.0, %v2288
    %2290 = vdwg.mxu0
    %v2291 = vadd.f32 %v2226, %v2245
    %v2292 = vadd.f32 %v2227, %v2259
    %v2293 = vadd.f32 %v2228, %v2273
    %v2294 = vadd.f32 %v2229, %v2287
    %v2295 = vadd.f32 %v2230, %v2247
    %v2296 = vadd.f32 %v2231, %v2261
    %v2297 = vadd.f32 %v2232, %v2275
    %v2298 = vadd.f32 %v2233, %v2289
    %v2299 = vxor.u32 %v2291, 2147483648
    %v2300 = vxor.u32 %v2295, 2147483648
    %v2301 = vmul.f32 %v2299, 1.442695
    %v2302 = vpow.pop %v2301
    %v2303 = vmul.f32 %v2300, 1.442695
    %v2304 = vpow.pop %v2303
    %v2305 = vadd.f32 %v2302, 1.0
    %v2306 = vadd.f32 %v2304, 1.0
    %v2307 = vrcp.pop %v2305
    %v2308 = vmul.f32 %v2305, %v2307
    %v2309 = vsub.f32 1.0, %v2308
    %v2310 = vmul.f32 %v2307, %v2309
    %v2311 = vadd.f32 %v2307, %v2310
    %vm2312 = vweird.f32 %v2305
    %vm2313 = vweird.f32 %v2307
    %vm2314 = vmor %vm2312, %vm2313
    %v2315 = vsel %vm2314, %v2307, %v2311
    %v2316 = vand.u32 2147483647, %v2305
    %vm2317 = vcmp.eq.f32.partialorder %v2316, 8.507059e+37
    %v2318 = vand.u32 %v2305, 2147483648
    %v2319 = vor.u32 1.1754944e-38, %v2318
    %v2320 = vsel %vm2317, %v2319, %v2315
    %v2321 = vmul.f32 1.0, %v2320
    %v2322 = vrcp.pop %v2306
    %v2323 = vmul.f32 %v2306, %v2322
    %v2324 = vsub.f32 1.0, %v2323
    %v2325 = vmul.f32 %v2322, %v2324
    %v2326 = vadd.f32 %v2322, %v2325
    %vm2327 = vweird.f32 %v2306
    %vm2328 = vweird.f32 %v2322
    %vm2329 = vmor %vm2327, %vm2328
    %v2330 = vsel %vm2329, %v2322, %v2326
    %v2331 = vand.u32 2147483647, %v2306
    %vm2332 = vcmp.eq.f32.partialorder %v2331, 8.507059e+37
    %v2333 = vand.u32 %v2306, 2147483648
    %v2334 = vor.u32 1.1754944e-38, %v2333
    %v2335 = vsel %vm2332, %v2334, %v2330
    %v2336 = vmul.f32 1.0, %v2335
    %v2337 = vxor.u32 %v2292, 2147483648
    %v2338 = vxor.u32 %v2296, 2147483648
    %v2339 = vmul.f32 %v2337, 1.442695
    %v2340 = vpow.pop %v2339
    %v2341 = vmul.f32 %v2338, 1.442695
    %v2342 = vpow.pop %v2341
    %v2343 = vadd.f32 %v2340, 1.0
    %v2344 = vadd.f32 %v2342, 1.0
    %v2345 = vrcp.pop %v2343
    %v2346 = vmul.f32 %v2343, %v2345
    %v2347 = vsub.f32 1.0, %v2346
    %v2348 = vmul.f32 %v2345, %v2347
    %v2349 = vadd.f32 %v2345, %v2348
    %vm2350 = vweird.f32 %v2343
    %vm2351 = vweird.f32 %v2345
    %vm2352 = vmor %vm2350, %vm2351
    %v2353 = vsel %vm2352, %v2345, %v2349
    %v2354 = vand.u32 2147483647, %v2343
    %vm2355 = vcmp.eq.f32.partialorder %v2354, 8.507059e+37
    %v2356 = vand.u32 %v2343, 2147483648
    %v2357 = vor.u32 1.1754944e-38, %v2356
    %v2358 = vsel %vm2355, %v2357, %v2353
    %v2359 = vmul.f32 1.0, %v2358
    %v2360 = vrcp.pop %v2344
    %v2361 = vmul.f32 %v2344, %v2360
    %v2362 = vsub.f32 1.0, %v2361
    %v2363 = vmul.f32 %v2360, %v2362
    %v2364 = vadd.f32 %v2360, %v2363
    %vm2365 = vweird.f32 %v2344
    %vm2366 = vweird.f32 %v2360
    %vm2367 = vmor %vm2365, %vm2366
    %v2368 = vsel %vm2367, %v2360, %v2364
    %v2369 = vand.u32 2147483647, %v2344
    %vm2370 = vcmp.eq.f32.partialorder %v2369, 8.507059e+37
    %v2371 = vand.u32 %v2344, 2147483648
    %v2372 = vor.u32 1.1754944e-38, %v2371
    %v2373 = vsel %vm2370, %v2372, %v2368
    %v2374 = vmul.f32 1.0, %v2373
    %v2375 = vtanh.pop %v2293
    %v2376 = vtanh.pop %v2297
    %v2377 = vxor.u32 %v2294, 2147483648
    %v2378 = vxor.u32 %v2298, 2147483648
    %v2379 = vmul.f32 %v2377, 1.442695
    %v2380 = vpow.pop %v2379
    %v2381 = vmul.f32 %v2378, 1.442695
    %v2382 = vpow.pop %v2381
    %v2383 = vadd.f32 %v2380, 1.0
    %v2384 = vadd.f32 %v2382, 1.0
    %v2385 = vrcp.pop %v2383
    %v2386 = vmul.f32 %v2383, %v2385
    %v2387 = vsub.f32 1.0, %v2386
    %v2388 = vmul.f32 %v2385, %v2387
    %v2389 = vadd.f32 %v2385, %v2388
    %vm2390 = vweird.f32 %v2383
    %vm2391 = vweird.f32 %v2385
    %vm2392 = vmor %vm2390, %vm2391
    %v2393 = vsel %vm2392, %v2385, %v2389
    %v2394 = vand.u32 2147483647, %v2383
    %vm2395 = vcmp.eq.f32.partialorder %v2394, 8.507059e+37
    %v2396 = vand.u32 %v2383, 2147483648
    %v2397 = vor.u32 1.1754944e-38, %v2396
    %v2398 = vsel %vm2395, %v2397, %v2393
    %v2399 = vmul.f32 1.0, %v2398
    %v2400 = vrcp.pop %v2384
    %v2401 = vmul.f32 %v2384, %v2400
    %v2402 = vsub.f32 1.0, %v2401
    %v2403 = vmul.f32 %v2400, %v2402
    %v2404 = vadd.f32 %v2400, %v2403
    %vm2405 = vweird.f32 %v2384
    %vm2406 = vweird.f32 %v2400
    %vm2407 = vmor %vm2405, %vm2406
    %v2408 = vsel %vm2407, %v2400, %v2404
    %v2409 = vand.u32 2147483647, %v2384
    %vm2410 = vcmp.eq.f32.partialorder %v2409, 8.507059e+37
    %v2411 = vand.u32 %v2384, 2147483648
    %v2412 = vor.u32 1.1754944e-38, %v2411
    %v2413 = vsel %vm2410, %v2412, %v2408
    %v2414 = vmul.f32 1.0, %v2413
    %v2415 = vmul.f32 %v2359, %v2217
    %v2416 = vmul.f32 %v2374, %v2218
    %v2417 = vmul.f32 %v2321, %v2375
    %v2418 = vmul.f32 %v2336, %v2376
    %v2419 = vadd.f32 %v2415, %v2417
    %v2420 = vadd.f32 %v2416, %v2418
    %v2421 = vtanh.pop %v2419
    %v2422 = vtanh.pop %v2420
    %v2423 = vmul.f32 %v2399, %v2421
    %v2424 = vmul.f32 %v2414, %v2422
    %2425 = vst [vmem:[#allocation12] sm:$0xff] %v2423
    %2426 = vst [vmem:[#allocation12 + $0x8] sm:$0xff] %v2424
    %2427 = vst [vmem:[#allocation2] sm:$0xff] %v2419
    %2428 = vst [vmem:[#allocation2 + $0x8] sm:$0xff] %v2420
    // Predicated region
    $region38: #{tpu_custom_call.1} parent=1 // pred_check
      _
    $region39: #{tpu_custom_call.1} parent=1 // pred_check_branch
      %2430 = sbr.rel (0) target = $region41
    $region40: #{tpu_custom_call.1} parent=1 // pred_region
      %2432 = vsyncadd [#allocation6], 0
      %s2433 = sshll.u32 [#allocation12], 4
      %s2434 = int_to_ptr.vmem [resolvable:$true] %s2433
      %s2435 = sshll.u32 %s4, 4
      %s2436 = int_to_ptr.hbm [resolvable:$true] %s2435
      %2441 = dma.vmem_to_hbm [thread:$0]  %s2434, 256, %s2436, [#allocation6], 128, 128, 8
    $region41: #{tpu_custom_call.1} parent=1 // pred_fallthru
      _
    // Predicated region
    $region42: #{tpu_custom_call.1} parent=1 // pred_check
      _
    $region43: #{tpu_custom_call.1} parent=1 // pred_check_branch
      %2443 = sbr.rel (0) target = $region45
    $region44: #{tpu_custom_call.1} parent=1 // pred_region
      %2445 = dma.done [#allocation6], 256
    $region45: #{tpu_custom_call.1} parent=1 // pred_fallthru
      _
    %2446 = vsyncpa [#allocation5], 1
    %2447 = vsyncpa [#allocation8], 1
    %2448 = vsyncpa [#allocation11], 1
    %2449 = vsyncpa [#allocation6], 1

</llo_original>
